<compile_context>
chip_gen: v7x
topology: tpu7x:2x2x1
jax: 0.10.0
libtpu: 0.0.40
codegen_flags: <defaults>
</compile_context>

<pallas_src>
import functools

import jax
import jax.numpy as jnp
from jax import lax
from jax.experimental import pallas as pl
from jax.experimental.pallas import tpu as pltpu

EPS = 1e-5  # nn.BatchNorm2d default eps


# ---------------------------------------------------------------------------
# Fused kernel: maxpool2x2 -> conv3x3+BN+ReLU -> conv3x3+BN+ReLU
# One batch element per grid step; everything stays in VMEM.
# ---------------------------------------------------------------------------
def _zero_halo(ref, Hi, Wi, C, dtype):
    """Zero the 1-wide border of a (Hi+2, Wi+2, C) padded scratch."""
    ref[0:1, :, :] = jnp.zeros((1, Wi + 2, C), dtype)
    ref[Hi + 1:Hi + 2, :, :] = jnp.zeros((1, Wi + 2, C), dtype)
    ref[:, 0:1, :] = jnp.zeros((Hi + 2, 1, C), dtype)
    ref[:, Wi + 1:Wi + 2, :] = jnp.zeros((Hi + 2, 1, C), dtype)


def _down_fused_kernel(x_ref, w1_ref, w2_ref, s1_ref, b1_ref, s2_ref, b2_ref,
                       o_ref, pad1_ref, pad2_ref, col1_ref, col2_ref, *,
                       Ho, Wo, Cin, Cmid, Cout):
    P = Ho * Wo

    # ---- 2x2 max-pool (stride 2) -----------------------------------------
    # x_ref block: (1, H, 2, Wo, Cin) — both pooling partners live on leading
    # (non-minor) dims, so the reduction is layout-free (no lane ops).
    xv = x_ref[0]                                           # (H, 2, Wo, Cin)
    wmax = jnp.maximum(xv[:, 0], xv[:, 1])                  # max over W pair -> (H, Wo, Cin)
    pooled = jnp.max(wmax.reshape(Ho, 2, Wo, Cin), axis=1)  # max over H pair -> (Ho, Wo, Cin)

    # ---- conv1 (3x3, pad=1, no bias) + folded BN + ReLU --------------------
    # Padded f32 scratch: zero only the 1-wide halo (interior fully overwritten
    # every step), then a single im2col matmul with K = 9*Cin.
    _zero_halo(pad1_ref, Ho, Wo, Cin, jnp.float32)
    pad1_ref[1:Ho + 1, 1:Wo + 1, :] = pooled
    for k in range(9):                                      # static unroll: 9 shifted writes
        dy, dx = k // 3, k % 3
        col1_ref[:, :, k * Cin:(k + 1) * Cin] = (
            pad1_ref[dy:dy + Ho, dx:dx + Wo, :].astype(jnp.bfloat16))
    a1 = col1_ref[...].reshape(P, 9 * Cin)                  # leading-dim merge (layout-safe)
    acc1 = jnp.dot(a1, w1_ref[...], preferred_element_type=jnp.float32)
    y1 = jnp.maximum(acc1 * s1_ref[...] + b1_ref[...], 0.0)  # (P, Cmid), f32 epilogue

    # ---- conv2 (3x3, pad=1, no bias) + folded BN + ReLU --------------------
    _zero_halo(pad2_ref, Ho, Wo, Cmid, jnp.float32)
    pad2_ref[1:Ho + 1, 1:Wo + 1, :] = y1.reshape(Ho, Wo, Cmid)
    for k in range(9):
        dy, dx = k // 3, k % 3
        col2_ref[:, :, k * Cmid:(k + 1) * Cmid] = (
            pad2_ref[dy:dy + Ho, dx:dx + Wo, :].astype(jnp.bfloat16))
    a2 = col2_ref[...].reshape(P, 9 * Cmid)
    acc2 = jnp.dot(a2, w2_ref[...], preferred_element_type=jnp.float32)
    y2 = jnp.maximum(acc2 * s2_ref[...] + b2_ref[...], 0.0)  # (P, Cout)

    o_ref[0] = y2.astype(o_ref.dtype)


# ---------------------------------------------------------------------------
# Parameters (deterministic, in-script) and BN folding.
# ---------------------------------------------------------------------------
def fold_bn(gamma, beta, mean, var):
    scale = gamma / jnp.sqrt(var + EPS)
    bias = beta - mean * scale
    return scale, bias


def init_down_params(key, in_ch, out_ch):
    mid_ch = out_ch  # DoubleConv default: mid_channels = out_channels
    ks = jax.random.split(key, 4)

    def bn_params(k, c):
        k1, k2, k3, k4 = jax.random.split(k, 4)
        gamma = jax.random.uniform(k1, (c,), jnp.float32, 0.5, 1.5)
        beta = 0.1 * jax.random.normal(k2, (c,), jnp.float32)
        mean = 0.1 * jax.random.normal(k3, (c,), jnp.float32)
        var = jax.random.uniform(k4, (c,), jnp.float32, 0.5, 1.5)
        return gamma, beta, mean, var

    return {
        "w1": 0.1 * jax.random.normal(ks[0], (3, 3, in_ch, mid_ch), jnp.float32),  # HWIO
        "w2": 0.1 * jax.random.normal(ks[1], (3, 3, mid_ch, out_ch), jnp.float32),  # HWIO
        "bn1": bn_params(ks[2], mid_ch),
        "bn2": bn_params(ks[3], out_ch),
    }


# ---------------------------------------------------------------------------
# Public forward: NCHW in -> NCHW out (PyTorch semantics), one fused pallas_call.
# ---------------------------------------------------------------------------
def down_forward(x_nchw, params):
    # TODO(synk): BatchNorm is applied in inference mode (running stats folded into
    # scale/bias); PyTorch training-mode batch statistics are not reproduced.
    N, Cin, H, W = x_nchw.shape
    assert H % 2 == 0 and W % 2 == 0
    Ho, Wo = H // 2, W // 2
    P = Ho * Wo
    w1, w2 = params["w1"], params["w2"]
    Cmid, Cout = w1.shape[-1], w2.shape[-1]

    s1, b1 = fold_bn(*params["bn1"])
    s2, b2 = fold_bn(*params["bn2"])

    # One fused XLA transpose: NCHW -> (N, H, 2, Wo, Cin). Both 2x2-pool partners end up
    # on leading dims so the kernel needs no lane slicing / minor-dim reshapes.
    x_p = jnp.transpose(x_nchw.reshape(N, Cin, H, Wo, 2), (0, 2, 4, 3, 1))

    # Conv weights pre-reshaped to (9*Cin, Cout) bf16 for the single im2col matmul;
    # row ordering ((dy*3+dx)*Cin + ci) matches the in-kernel column-block order.
    w1m = w1.reshape(9 * Cin, Cmid).astype(jnp.bfloat16)
    w2m = w2.reshape(9 * Cmid, Cout).astype(jnp.bfloat16)
    s1r = s1.reshape(1, Cmid).astype(jnp.float32)
    b1r = b1.reshape(1, Cmid).astype(jnp.float32)
    s2r = s2.reshape(1, Cout).astype(jnp.float32)
    b2r = b2.reshape(1, Cout).astype(jnp.float32)

    kernel = functools.partial(_down_fused_kernel,
                               Ho=Ho, Wo=Wo, Cin=Cin, Cmid=Cmid, Cout=Cout)

    flops = 2 * N * P * (9 * Cin) * Cmid + 2 * N * P * (9 * Cmid) * Cout
    bytes_accessed = (x_p.size * x_p.dtype.itemsize
                      + w1m.size * 2 + w2m.size * 2
                      + (s1r.size + b1r.size + s2r.size + b2r.size) * 4
                      + N * P * Cout * 4)

    out = pl.pallas_call(
        kernel,
        out_shape=jax.ShapeDtypeStruct((N, P, Cout), x_nchw.dtype),
        grid=(N,),
        in_specs=[
            pl.BlockSpec((1, H, 2, Wo, Cin), lambda n: (n, 0, 0, 0, 0)),
            pl.BlockSpec((9 * Cin, Cmid), lambda n: (0, 0)),
            pl.BlockSpec((9 * Cmid, Cout), lambda n: (0, 0)),
            pl.BlockSpec((1, Cmid), lambda n: (0, 0)),
            pl.BlockSpec((1, Cmid), lambda n: (0, 0)),
            pl.BlockSpec((1, Cout), lambda n: (0, 0)),
            pl.BlockSpec((1, Cout), lambda n: (0, 0)),
        ],
        out_specs=pl.BlockSpec((1, P, Cout), lambda n: (n, 0, 0)),
        scratch_shapes=[
            pltpu.VMEM((Ho + 2, Wo + 2, Cin), jnp.float32),    # padded pooled activation
            pltpu.VMEM((Ho + 2, Wo + 2, Cmid), jnp.float32),   # padded mid activation
            pltpu.VMEM((Ho, Wo, 9 * Cin), jnp.bfloat16),       # im2col operand, conv1
            pltpu.VMEM((Ho, Wo, 9 * Cmid), jnp.bfloat16),      # im2col operand, conv2
        ],
        compiler_params=pltpu.CompilerParams(
            dimension_semantics=("parallel",)),                # batch shards across TCs (v7x)
        cost_estimate=pl.CostEstimate(flops=flops, transcendentals=0,
                                      bytes_accessed=bytes_accessed),
    )(x_p, w1m, w2m, s1r, b1r, s2r, b2r)

    # (N, P, Cout) -> NHWC -> NCHW (single small XLA transpose of the final output).
    return jnp.transpose(out.reshape(N, Ho, Wo, Cout), (0, 3, 1, 2))


# ---------------------------------------------------------------------------
# Pure-JAX reference (for correctness check only).
# ---------------------------------------------------------------------------
def down_reference(x_nchw, params):
    x = jnp.transpose(x_nchw, (0, 2, 3, 1))
    N, H, W, C = x.shape
    x = x.reshape(N, H // 2, 2, W // 2, 2, C).max(axis=(2, 4))

    def block(y, w, bnp):
        y = lax.conv_general_dilated(y, w, (1, 1), "SAME",
                                     dimension_numbers=("NHWC", "HWIO", "NHWC"))
        gamma, beta, mean, var = bnp
        y = (y - mean) / jnp.sqrt(var + EPS) * gamma + beta
        return jnp.maximum(y, 0.0)

    x = block(x, params["w1"], params["bn1"])
    x = block(x, params["w2"], params["bn2"])
    return jnp.transpose(x, (0, 3, 1, 2))


if __name__ == "__main__":
    key = jax.random.PRNGKey(0)
    kx, kp = jax.random.split(key)

    N, Cin, H, W = 2, 4, 16, 16     # Down(in_channels=4, out_channels=8)
    Cout = 8
    x = jax.random.normal(kx, (N, Cin, H, W), jnp.float32)
    params = init_down_params(kp, Cin, Cout)

    out = jax.block_until_ready(down_forward(x, params))
    ref = jax.block_until_ready(down_reference(x, params))

    assert out.shape == (N, Cout, H // 2, W // 2), out.shape
    err = float(jnp.max(jnp.abs(out - ref)))
    assert jnp.allclose(out, ref, atol=2e-2, rtol=2e-2), err
    print("KERNEL_OK")
</pallas_src>

<mosaic_0001>
module attributes {stable_mosaic.version = 11 : i64} {
  func.func @_down_fused_kernel(%arg0: i32, %arg1: memref<1x16x2x8x4xf32, #tpu.memory_space<vmem>>, %arg2: memref<36x8xbf16, #tpu.memory_space<vmem>>, %arg3: memref<72x8xbf16, #tpu.memory_space<vmem>>, %arg4: memref<1x8xf32, #tpu.memory_space<vmem>>, %arg5: memref<1x8xf32, #tpu.memory_space<vmem>>, %arg6: memref<1x8xf32, #tpu.memory_space<vmem>>, %arg7: memref<1x8xf32, #tpu.memory_space<vmem>>, %arg8: memref<1x64x8xf32, #tpu.memory_space<vmem>>, %arg9: memref<10x10x4xf32, #tpu.memory_space<vmem>>, %arg10: memref<10x10x8xf32, #tpu.memory_space<vmem>>, %arg11: memref<8x8x36xbf16, #tpu.memory_space<vmem>>, %arg12: memref<8x8x72xbf16, #tpu.memory_space<vmem>>) attributes {dimension_semantics = [#tpu.dimension_semantics<parallel>], iteration_bounds = array<i64: 2>, scalar_prefetch = 0 : i64, scratch_operands = 4 : i64, tpu.core_type = #tpu.core_type<tc>, window_params = [{transform_indices = @transform_0, window_bounds = array<i64: 1, 16, 2, 8, 4>}, {pipeline_mode = #tpu.pipeline_mode<synchronous>, transform_indices = @transform_1, window_bounds = array<i64: 36, 8>}, {pipeline_mode = #tpu.pipeline_mode<synchronous>, transform_indices = @transform_2, window_bounds = array<i64: 72, 8>}, {pipeline_mode = #tpu.pipeline_mode<synchronous>, transform_indices = @transform_3, window_bounds = array<i64: 1, 8>}, {pipeline_mode = #tpu.pipeline_mode<synchronous>, transform_indices = @transform_4, window_bounds = array<i64: 1, 8>}, {pipeline_mode = #tpu.pipeline_mode<synchronous>, transform_indices = @transform_5, window_bounds = array<i64: 1, 8>}, {pipeline_mode = #tpu.pipeline_mode<synchronous>, transform_indices = @transform_6, window_bounds = array<i64: 1, 8>}, {transform_indices = @transform_7, window_bounds = array<i64: 1, 64, 8>}]} {
    %c0 = arith.constant 0 : index
    %c0_0 = arith.constant 0 : index
    %c0_1 = arith.constant 0 : index
    %c0_2 = arith.constant 0 : index
    %c0_3 = arith.constant 0 : index
    %0 = vector.load %arg1[%c0, %c0_0, %c0_1, %c0_2, %c0_3] : memref<1x16x2x8x4xf32, #tpu.memory_space<vmem>>, vector<1x16x2x8x4xf32>
    %1 = vector.shape_cast %0 : vector<1x16x2x8x4xf32> to vector<16x2x8x4xf32>
    %2 = vector.extract_strided_slice %1 {offsets = [0, 0, 0, 0], sizes = [16, 1, 8, 4], strides = [1, 1, 1, 1]} : vector<16x2x8x4xf32> to vector<16x1x8x4xf32>
    %3 = vector.shape_cast %2 : vector<16x1x8x4xf32> to vector<16x8x4xf32>
    %4 = vector.extract_strided_slice %1 {offsets = [0, 1, 0, 0], sizes = [16, 1, 8, 4], strides = [1, 1, 1, 1]} : vector<16x2x8x4xf32> to vector<16x1x8x4xf32>
    %5 = vector.shape_cast %4 : vector<16x1x8x4xf32> to vector<16x8x4xf32>
    %6 = arith.maximumf %3, %5 : vector<16x8x4xf32>
    %7 = vector.shape_cast %6 : vector<16x8x4xf32> to vector<8x2x8x4xf32>
    %cst = arith.constant dense<0xFF800000> : vector<8x8x4xf32>
    %8 = vector.multi_reduction <maximumf>, %7, %cst [1] : vector<8x2x8x4xf32> to vector<8x8x4xf32>
    %cst_4 = arith.constant 0.000000e+00 : f32
    %9 = vector.broadcast %cst_4 : f32 to vector<1x10x4xf32>
    %c0_5 = arith.constant 0 : index
    %c0_6 = arith.constant 0 : index
    %c0_7 = arith.constant 0 : index
    %10 = vector.load %arg9[%c0_5, %c0_6, %c0_7] : memref<10x10x4xf32, #tpu.memory_space<vmem>>, vector<1x10x4xf32>
    tpu.vector_store %arg9[%c0_5, %c0_6, %c0_7], %9 {strides = array<i32>} : memref<10x10x4xf32, #tpu.memory_space<vmem>>, vector<1x10x4xf32>,
    %cst_8 = arith.constant 0.000000e+00 : f32
    %11 = vector.broadcast %cst_8 : f32 to vector<1x10x4xf32>
    %c9 = arith.constant 9 : index
    %c0_9 = arith.constant 0 : index
    %c0_10 = arith.constant 0 : index
    %12 = vector.load %arg9[%c9, %c0_9, %c0_10] : memref<10x10x4xf32, #tpu.memory_space<vmem>>, vector<1x10x4xf32>
    tpu.vector_store %arg9[%c9, %c0_9, %c0_10], %11 {strides = array<i32>} : memref<10x10x4xf32, #tpu.memory_space<vmem>>, vector<1x10x4xf32>,
    %cst_11 = arith.constant 0.000000e+00 : f32
    %13 = vector.broadcast %cst_11 : f32 to vector<10x1x4xf32>
    %c0_12 = arith.constant 0 : index
    %c0_13 = arith.constant 0 : index
    %c0_14 = arith.constant 0 : index
    %14 = vector.load %arg9[%c0_12, %c0_13, %c0_14] : memref<10x10x4xf32, #tpu.memory_space<vmem>>, vector<10x1x4xf32>
    tpu.vector_store %arg9[%c0_12, %c0_13, %c0_14], %13 {strides = array<i32>} : memref<10x10x4xf32, #tpu.memory_space<vmem>>, vector<10x1x4xf32>,
    %cst_15 = arith.constant 0.000000e+00 : f32
    %15 = vector.broadcast %cst_15 : f32 to vector<10x1x4xf32>
    %c0_16 = arith.constant 0 : index
    %c9_17 = arith.constant 9 : index
    %c0_18 = arith.constant 0 : index
    %16 = vector.load %arg9[%c0_16, %c9_17, %c0_18] : memref<10x10x4xf32, #tpu.memory_space<vmem>>, vector<10x1x4xf32>
    tpu.vector_store %arg9[%c0_16, %c9_17, %c0_18], %15 {strides = array<i32>} : memref<10x10x4xf32, #tpu.memory_space<vmem>>, vector<10x1x4xf32>,
    %c1 = arith.constant 1 : index
    %c1_19 = arith.constant 1 : index
    %c0_20 = arith.constant 0 : index
    %17 = vector.load %arg9[%c1, %c1_19, %c0_20] : memref<10x10x4xf32, #tpu.memory_space<vmem>>, vector<8x8x4xf32>
    tpu.vector_store %arg9[%c1, %c1_19, %c0_20], %8 {strides = array<i32>} : memref<10x10x4xf32, #tpu.memory_space<vmem>>, vector<8x8x4xf32>,
    %c0_21 = arith.constant 0 : index
    %c0_22 = arith.constant 0 : index
    %c0_23 = arith.constant 0 : index
    %18 = vector.load %arg9[%c0_21, %c0_22, %c0_23] : memref<10x10x4xf32, #tpu.memory_space<vmem>>, vector<8x8x4xf32>
    %19 = arith.truncf %18 : vector<8x8x4xf32> to vector<8x8x4xbf16>
    %c0_24 = arith.constant 0 : index
    %c0_25 = arith.constant 0 : index
    %c0_26 = arith.constant 0 : index
    %20 = vector.load %arg11[%c0_24, %c0_25, %c0_26] : memref<8x8x36xbf16, #tpu.memory_space<vmem>>, vector<8x8x4xbf16>
    tpu.vector_store %arg11[%c0_24, %c0_25, %c0_26], %19 {strides = array<i32>} : memref<8x8x36xbf16, #tpu.memory_space<vmem>>, vector<8x8x4xbf16>,
    %c0_27 = arith.constant 0 : index
    %c1_28 = arith.constant 1 : index
    %c0_29 = arith.constant 0 : index
    %21 = vector.load %arg9[%c0_27, %c1_28, %c0_29] : memref<10x10x4xf32, #tpu.memory_space<vmem>>, vector<8x8x4xf32>
    %22 = arith.truncf %21 : vector<8x8x4xf32> to vector<8x8x4xbf16>
    %c0_30 = arith.constant 0 : index
    %c0_31 = arith.constant 0 : index
    %c4 = arith.constant 4 : index
    %23 = vector.load %arg11[%c0_30, %c0_31, %c4] : memref<8x8x36xbf16, #tpu.memory_space<vmem>>, vector<8x8x4xbf16>
    tpu.vector_store %arg11[%c0_30, %c0_31, %c4], %22 {strides = array<i32>} : memref<8x8x36xbf16, #tpu.memory_space<vmem>>, vector<8x8x4xbf16>,
    %c0_32 = arith.constant 0 : index
    %c2 = arith.constant 2 : index
    %c0_33 = arith.constant 0 : index
    %24 = vector.load %arg9[%c0_32, %c2, %c0_33] : memref<10x10x4xf32, #tpu.memory_space<vmem>>, vector<8x8x4xf32>
    %25 = arith.truncf %24 : vector<8x8x4xf32> to vector<8x8x4xbf16>
    %c0_34 = arith.constant 0 : index
    %c0_35 = arith.constant 0 : index
    %c8 = arith.constant 8 : index
    %26 = vector.load %arg11[%c0_34, %c0_35, %c8] : memref<8x8x36xbf16, #tpu.memory_space<vmem>>, vector<8x8x4xbf16>
    tpu.vector_store %arg11[%c0_34, %c0_35, %c8], %25 {strides = array<i32>} : memref<8x8x36xbf16, #tpu.memory_space<vmem>>, vector<8x8x4xbf16>,
    %c1_36 = arith.constant 1 : index
    %c0_37 = arith.constant 0 : index
    %c0_38 = arith.constant 0 : index
    %27 = vector.load %arg9[%c1_36, %c0_37, %c0_38] : memref<10x10x4xf32, #tpu.memory_space<vmem>>, vector<8x8x4xf32>
    %28 = arith.truncf %27 : vector<8x8x4xf32> to vector<8x8x4xbf16>
    %c0_39 = arith.constant 0 : index
    %c0_40 = arith.constant 0 : index
    %c12 = arith.constant 12 : index
    %29 = vector.load %arg11[%c0_39, %c0_40, %c12] : memref<8x8x36xbf16, #tpu.memory_space<vmem>>, vector<8x8x4xbf16>
    tpu.vector_store %arg11[%c0_39, %c0_40, %c12], %28 {strides = array<i32>} : memref<8x8x36xbf16, #tpu.memory_space<vmem>>, vector<8x8x4xbf16>,
    %c1_41 = arith.constant 1 : index
    %c1_42 = arith.constant 1 : index
    %c0_43 = arith.constant 0 : index
    %30 = vector.load %arg9[%c1_41, %c1_42, %c0_43] : memref<10x10x4xf32, #tpu.memory_space<vmem>>, vector<8x8x4xf32>
    %31 = arith.truncf %30 : vector<8x8x4xf32> to vector<8x8x4xbf16>
    %c0_44 = arith.constant 0 : index
    %c0_45 = arith.constant 0 : index
    %c16 = arith.constant 16 : index
    %32 = vector.load %arg11[%c0_44, %c0_45, %c16] : memref<8x8x36xbf16, #tpu.memory_space<vmem>>, vector<8x8x4xbf16>
    tpu.vector_store %arg11[%c0_44, %c0_45, %c16], %31 {strides = array<i32>} : memref<8x8x36xbf16, #tpu.memory_space<vmem>>, vector<8x8x4xbf16>,
    %c1_46 = arith.constant 1 : index
    %c2_47 = arith.constant 2 : index
    %c0_48 = arith.constant 0 : index
    %33 = vector.load %arg9[%c1_46, %c2_47, %c0_48] : memref<10x10x4xf32, #tpu.memory_space<vmem>>, vector<8x8x4xf32>
    %34 = arith.truncf %33 : vector<8x8x4xf32> to vector<8x8x4xbf16>
    %c0_49 = arith.constant 0 : index
    %c0_50 = arith.constant 0 : index
    %c20 = arith.constant 20 : index
    %35 = vector.load %arg11[%c0_49, %c0_50, %c20] : memref<8x8x36xbf16, #tpu.memory_space<vmem>>, vector<8x8x4xbf16>
    tpu.vector_store %arg11[%c0_49, %c0_50, %c20], %34 {strides = array<i32>} : memref<8x8x36xbf16, #tpu.memory_space<vmem>>, vector<8x8x4xbf16>,
    %c2_51 = arith.constant 2 : index
    %c0_52 = arith.constant 0 : index
    %c0_53 = arith.constant 0 : index
    %36 = vector.load %arg9[%c2_51, %c0_52, %c0_53] : memref<10x10x4xf32, #tpu.memory_space<vmem>>, vector<8x8x4xf32>
    %37 = arith.truncf %36 : vector<8x8x4xf32> to vector<8x8x4xbf16>
    %c0_54 = arith.constant 0 : index
    %c0_55 = arith.constant 0 : index
    %c24 = arith.constant 24 : index
    %38 = vector.load %arg11[%c0_54, %c0_55, %c24] : memref<8x8x36xbf16, #tpu.memory_space<vmem>>, vector<8x8x4xbf16>
    tpu.vector_store %arg11[%c0_54, %c0_55, %c24], %37 {strides = array<i32>} : memref<8x8x36xbf16, #tpu.memory_space<vmem>>, vector<8x8x4xbf16>,
    %c2_56 = arith.constant 2 : index
    %c1_57 = arith.constant 1 : index
    %c0_58 = arith.constant 0 : index
    %39 = vector.load %arg9[%c2_56, %c1_57, %c0_58] : memref<10x10x4xf32, #tpu.memory_space<vmem>>, vector<8x8x4xf32>
    %40 = arith.truncf %39 : vector<8x8x4xf32> to vector<8x8x4xbf16>
    %c0_59 = arith.constant 0 : index
    %c0_60 = arith.constant 0 : index
    %c28 = arith.constant 28 : index
    %41 = vector.load %arg11[%c0_59, %c0_60, %c28] : memref<8x8x36xbf16, #tpu.memory_space<vmem>>, vector<8x8x4xbf16>
    tpu.vector_store %arg11[%c0_59, %c0_60, %c28], %40 {strides = array<i32>} : memref<8x8x36xbf16, #tpu.memory_space<vmem>>, vector<8x8x4xbf16>,
    %c2_61 = arith.constant 2 : index
    %c2_62 = arith.constant 2 : index
    %c0_63 = arith.constant 0 : index
    %42 = vector.load %arg9[%c2_61, %c2_62, %c0_63] : memref<10x10x4xf32, #tpu.memory_space<vmem>>, vector<8x8x4xf32>
    %43 = arith.truncf %42 : vector<8x8x4xf32> to vector<8x8x4xbf16>
    %c0_64 = arith.constant 0 : index
    %c0_65 = arith.constant 0 : index
    %c32 = arith.constant 32 : index
    %44 = vector.load %arg11[%c0_64, %c0_65, %c32] : memref<8x8x36xbf16, #tpu.memory_space<vmem>>, vector<8x8x4xbf16>
    tpu.vector_store %arg11[%c0_64, %c0_65, %c32], %43 {strides = array<i32>} : memref<8x8x36xbf16, #tpu.memory_space<vmem>>, vector<8x8x4xbf16>,
    %c0_66 = arith.constant 0 : index
    %c0_67 = arith.constant 0 : index
    %c0_68 = arith.constant 0 : index
    %45 = vector.load %arg11[%c0_66, %c0_67, %c0_68] : memref<8x8x36xbf16, #tpu.memory_space<vmem>>, vector<8x8x36xbf16>
    %46 = vector.shape_cast %45 : vector<8x8x36xbf16> to vector<64x36xbf16>
    %c0_69 = arith.constant 0 : index
    %c0_70 = arith.constant 0 : index
    %47 = vector.load %arg2[%c0_69, %c0_70] : memref<36x8xbf16, #tpu.memory_space<vmem>>, vector<36x8xbf16>
    %cst_71 = arith.constant dense<0.000000e+00> : vector<64x8xf32>
    %48 = tpu.matmul %46, %47, %cst_71 {dimension_numbers = #tpu.dot_dimension_numbers<[1], [0], [0], [1], [0, 0, 1, 1], [], []>} : vector<64x36xbf16>, vector<36x8xbf16>, vector<64x8xf32> -> vector<64x8xf32>
    %c0_72 = arith.constant 0 : index
    %c0_73 = arith.constant 0 : index
    %49 = vector.load %arg4[%c0_72, %c0_73] : memref<1x8xf32, #tpu.memory_space<vmem>>, vector<1x8xf32>
    %50 = vector.broadcast %49 : vector<1x8xf32> to vector<64x8xf32>
    %51 = arith.mulf %48, %50 : vector<64x8xf32>
    %c0_74 = arith.constant 0 : index
    %c0_75 = arith.constant 0 : index
    %52 = vector.load %arg5[%c0_74, %c0_75] : memref<1x8xf32, #tpu.memory_space<vmem>>, vector<1x8xf32>
    %53 = vector.broadcast %52 : vector<1x8xf32> to vector<64x8xf32>
    %54 = arith.addf %51, %53 : vector<64x8xf32>
    %cst_76 = arith.constant 0.000000e+00 : f32
    %55 = vector.broadcast %cst_76 : f32 to vector<64x8xf32>
    %56 = arith.maximumf %54, %55 : vector<64x8xf32>
    %cst_77 = arith.constant 0.000000e+00 : f32
    %57 = vector.broadcast %cst_77 : f32 to vector<1x10x8xf32>
    %c0_78 = arith.constant 0 : index
    %c0_79 = arith.constant 0 : index
    %c0_80 = arith.constant 0 : index
    %58 = vector.load %arg10[%c0_78, %c0_79, %c0_80] : memref<10x10x8xf32, #tpu.memory_space<vmem>>, vector<1x10x8xf32>
    tpu.vector_store %arg10[%c0_78, %c0_79, %c0_80], %57 {strides = array<i32>} : memref<10x10x8xf32, #tpu.memory_space<vmem>>, vector<1x10x8xf32>,
    %cst_81 = arith.constant 0.000000e+00 : f32
    %59 = vector.broadcast %cst_81 : f32 to vector<1x10x8xf32>
    %c9_82 = arith.constant 9 : index
    %c0_83 = arith.constant 0 : index
    %c0_84 = arith.constant 0 : index
    %60 = vector.load %arg10[%c9_82, %c0_83, %c0_84] : memref<10x10x8xf32, #tpu.memory_space<vmem>>, vector<1x10x8xf32>
    tpu.vector_store %arg10[%c9_82, %c0_83, %c0_84], %59 {strides = array<i32>} : memref<10x10x8xf32, #tpu.memory_space<vmem>>, vector<1x10x8xf32>,
    %cst_85 = arith.constant 0.000000e+00 : f32
    %61 = vector.broadcast %cst_85 : f32 to vector<10x1x8xf32>
    %c0_86 = arith.constant 0 : index
    %c0_87 = arith.constant 0 : index
    %c0_88 = arith.constant 0 : index
    %62 = vector.load %arg10[%c0_86, %c0_87, %c0_88] : memref<10x10x8xf32, #tpu.memory_space<vmem>>, vector<10x1x8xf32>
    tpu.vector_store %arg10[%c0_86, %c0_87, %c0_88], %61 {strides = array<i32>} : memref<10x10x8xf32, #tpu.memory_space<vmem>>, vector<10x1x8xf32>,
    %cst_89 = arith.constant 0.000000e+00 : f32
    %63 = vector.broadcast %cst_89 : f32 to vector<10x1x8xf32>
    %c0_90 = arith.constant 0 : index
    %c9_91 = arith.constant 9 : index
    %c0_92 = arith.constant 0 : index
    %64 = vector.load %arg10[%c0_90, %c9_91, %c0_92] : memref<10x10x8xf32, #tpu.memory_space<vmem>>, vector<10x1x8xf32>
    tpu.vector_store %arg10[%c0_90, %c9_91, %c0_92], %63 {strides = array<i32>} : memref<10x10x8xf32, #tpu.memory_space<vmem>>, vector<10x1x8xf32>,
    %65 = vector.shape_cast %56 : vector<64x8xf32> to vector<8x8x8xf32>
    %c1_93 = arith.constant 1 : index
    %c1_94 = arith.constant 1 : index
    %c0_95 = arith.constant 0 : index
    %66 = vector.load %arg10[%c1_93, %c1_94, %c0_95] : memref<10x10x8xf32, #tpu.memory_space<vmem>>, vector<8x8x8xf32>
    tpu.vector_store %arg10[%c1_93, %c1_94, %c0_95], %65 {strides = array<i32>} : memref<10x10x8xf32, #tpu.memory_space<vmem>>, vector<8x8x8xf32>,
    %c0_96 = arith.constant 0 : index
    %c0_97 = arith.constant 0 : index
    %c0_98 = arith.constant 0 : index
    %67 = vector.load %arg10[%c0_96, %c0_97, %c0_98] : memref<10x10x8xf32, #tpu.memory_space<vmem>>, vector<8x8x8xf32>
    %68 = arith.truncf %67 : vector<8x8x8xf32> to vector<8x8x8xbf16>
    %c0_99 = arith.constant 0 : index
    %c0_100 = arith.constant 0 : index
    %c0_101 = arith.constant 0 : index
    %69 = vector.load %arg12[%c0_99, %c0_100, %c0_101] : memref<8x8x72xbf16, #tpu.memory_space<vmem>>, vector<8x8x8xbf16>
    tpu.vector_store %arg12[%c0_99, %c0_100, %c0_101], %68 {strides = array<i32>} : memref<8x8x72xbf16, #tpu.memory_space<vmem>>, vector<8x8x8xbf16>,
    %c0_102 = arith.constant 0 : index
    %c1_103 = arith.constant 1 : index
    %c0_104 = arith.constant 0 : index
    %70 = vector.load %arg10[%c0_102, %c1_103, %c0_104] : memref<10x10x8xf32, #tpu.memory_space<vmem>>, vector<8x8x8xf32>
    %71 = arith.truncf %70 : vector<8x8x8xf32> to vector<8x8x8xbf16>
    %c0_105 = arith.constant 0 : index
    %c0_106 = arith.constant 0 : index
    %c8_107 = arith.constant 8 : index
    %72 = vector.load %arg12[%c0_105, %c0_106, %c8_107] : memref<8x8x72xbf16, #tpu.memory_space<vmem>>, vector<8x8x8xbf16>
    tpu.vector_store %arg12[%c0_105, %c0_106, %c8_107], %71 {strides = array<i32>} : memref<8x8x72xbf16, #tpu.memory_space<vmem>>, vector<8x8x8xbf16>,
    %c0_108 = arith.constant 0 : index
    %c2_109 = arith.constant 2 : index
    %c0_110 = arith.constant 0 : index
    %73 = vector.load %arg10[%c0_108, %c2_109, %c0_110] : memref<10x10x8xf32, #tpu.memory_space<vmem>>, vector<8x8x8xf32>
    %74 = arith.truncf %73 : vector<8x8x8xf32> to vector<8x8x8xbf16>
    %c0_111 = arith.constant 0 : index
    %c0_112 = arith.constant 0 : index
    %c16_113 = arith.constant 16 : index
    %75 = vector.load %arg12[%c0_111, %c0_112, %c16_113] : memref<8x8x72xbf16, #tpu.memory_space<vmem>>, vector<8x8x8xbf16>
    tpu.vector_store %arg12[%c0_111, %c0_112, %c16_113], %74 {strides = array<i32>} : memref<8x8x72xbf16, #tpu.memory_space<vmem>>, vector<8x8x8xbf16>,
    %c1_114 = arith.constant 1 : index
    %c0_115 = arith.constant 0 : index
    %c0_116 = arith.constant 0 : index
    %76 = vector.load %arg10[%c1_114, %c0_115, %c0_116] : memref<10x10x8xf32, #tpu.memory_space<vmem>>, vector<8x8x8xf32>
    %77 = arith.truncf %76 : vector<8x8x8xf32> to vector<8x8x8xbf16>
    %c0_117 = arith.constant 0 : index
    %c0_118 = arith.constant 0 : index
    %c24_119 = arith.constant 24 : index
    %78 = vector.load %arg12[%c0_117, %c0_118, %c24_119] : memref<8x8x72xbf16, #tpu.memory_space<vmem>>, vector<8x8x8xbf16>
    tpu.vector_store %arg12[%c0_117, %c0_118, %c24_119], %77 {strides = array<i32>} : memref<8x8x72xbf16, #tpu.memory_space<vmem>>, vector<8x8x8xbf16>,
    %c1_120 = arith.constant 1 : index
    %c1_121 = arith.constant 1 : index
    %c0_122 = arith.constant 0 : index
    %79 = vector.load %arg10[%c1_120, %c1_121, %c0_122] : memref<10x10x8xf32, #tpu.memory_space<vmem>>, vector<8x8x8xf32>
    %80 = arith.truncf %79 : vector<8x8x8xf32> to vector<8x8x8xbf16>
    %c0_123 = arith.constant 0 : index
    %c0_124 = arith.constant 0 : index
    %c32_125 = arith.constant 32 : index
    %81 = vector.load %arg12[%c0_123, %c0_124, %c32_125] : memref<8x8x72xbf16, #tpu.memory_space<vmem>>, vector<8x8x8xbf16>
    tpu.vector_store %arg12[%c0_123, %c0_124, %c32_125], %80 {strides = array<i32>} : memref<8x8x72xbf16, #tpu.memory_space<vmem>>, vector<8x8x8xbf16>,
    %c1_126 = arith.constant 1 : index
    %c2_127 = arith.constant 2 : index
    %c0_128 = arith.constant 0 : index
    %82 = vector.load %arg10[%c1_126, %c2_127, %c0_128] : memref<10x10x8xf32, #tpu.memory_space<vmem>>, vector<8x8x8xf32>
    %83 = arith.truncf %82 : vector<8x8x8xf32> to vector<8x8x8xbf16>
    %c0_129 = arith.constant 0 : index
    %c0_130 = arith.constant 0 : index
    %c40 = arith.constant 40 : index
    %84 = vector.load %arg12[%c0_129, %c0_130, %c40] : memref<8x8x72xbf16, #tpu.memory_space<vmem>>, vector<8x8x8xbf16>
    tpu.vector_store %arg12[%c0_129, %c0_130, %c40], %83 {strides = array<i32>} : memref<8x8x72xbf16, #tpu.memory_space<vmem>>, vector<8x8x8xbf16>,
    %c2_131 = arith.constant 2 : index
    %c0_132 = arith.constant 0 : index
    %c0_133 = arith.constant 0 : index
    %85 = vector.load %arg10[%c2_131, %c0_132, %c0_133] : memref<10x10x8xf32, #tpu.memory_space<vmem>>, vector<8x8x8xf32>
    %86 = arith.truncf %85 : vector<8x8x8xf32> to vector<8x8x8xbf16>
    %c0_134 = arith.constant 0 : index
    %c0_135 = arith.constant 0 : index
    %c48 = arith.constant 48 : index
    %87 = vector.load %arg12[%c0_134, %c0_135, %c48] : memref<8x8x72xbf16, #tpu.memory_space<vmem>>, vector<8x8x8xbf16>
    tpu.vector_store %arg12[%c0_134, %c0_135, %c48], %86 {strides = array<i32>} : memref<8x8x72xbf16, #tpu.memory_space<vmem>>, vector<8x8x8xbf16>,
    %c2_136 = arith.constant 2 : index
    %c1_137 = arith.constant 1 : index
    %c0_138 = arith.constant 0 : index
    %88 = vector.load %arg10[%c2_136, %c1_137, %c0_138] : memref<10x10x8xf32, #tpu.memory_space<vmem>>, vector<8x8x8xf32>
    %89 = arith.truncf %88 : vector<8x8x8xf32> to vector<8x8x8xbf16>
    %c0_139 = arith.constant 0 : index
    %c0_140 = arith.constant 0 : index
    %c56 = arith.constant 56 : index
    %90 = vector.load %arg12[%c0_139, %c0_140, %c56] : memref<8x8x72xbf16, #tpu.memory_space<vmem>>, vector<8x8x8xbf16>
    tpu.vector_store %arg12[%c0_139, %c0_140, %c56], %89 {strides = array<i32>} : memref<8x8x72xbf16, #tpu.memory_space<vmem>>, vector<8x8x8xbf16>,
    %c2_141 = arith.constant 2 : index
    %c2_142 = arith.constant 2 : index
    %c0_143 = arith.constant 0 : index
    %91 = vector.load %arg10[%c2_141, %c2_142, %c0_143] : memref<10x10x8xf32, #tpu.memory_space<vmem>>, vector<8x8x8xf32>
    %92 = arith.truncf %91 : vector<8x8x8xf32> to vector<8x8x8xbf16>
    %c0_144 = arith.constant 0 : index
    %c0_145 = arith.constant 0 : index
    %c64 = arith.constant 64 : index
    %93 = vector.load %arg12[%c0_144, %c0_145, %c64] : memref<8x8x72xbf16, #tpu.memory_space<vmem>>, vector<8x8x8xbf16>
    tpu.vector_store %arg12[%c0_144, %c0_145, %c64], %92 {strides = array<i32>} : memref<8x8x72xbf16, #tpu.memory_space<vmem>>, vector<8x8x8xbf16>,
    %c0_146 = arith.constant 0 : index
    %c0_147 = arith.constant 0 : index
    %c0_148 = arith.constant 0 : index
    %94 = vector.load %arg12[%c0_146, %c0_147, %c0_148] : memref<8x8x72xbf16, #tpu.memory_space<vmem>>, vector<8x8x72xbf16>
    %95 = vector.shape_cast %94 : vector<8x8x72xbf16> to vector<64x72xbf16>
    %c0_149 = arith.constant 0 : index
    %c0_150 = arith.constant 0 : index
    %96 = vector.load %arg3[%c0_149, %c0_150] : memref<72x8xbf16, #tpu.memory_space<vmem>>, vector<72x8xbf16>
    %cst_151 = arith.constant dense<0.000000e+00> : vector<64x8xf32>
    %97 = tpu.matmul %95, %96, %cst_151 {dimension_numbers = #tpu.dot_dimension_numbers<[1], [0], [0], [1], [0, 0, 1, 1], [], []>} : vector<64x72xbf16>, vector<72x8xbf16>, vector<64x8xf32> -> vector<64x8xf32>
    %c0_152 = arith.constant 0 : index
    %c0_153 = arith.constant 0 : index
    %98 = vector.load %arg6[%c0_152, %c0_153] : memref<1x8xf32, #tpu.memory_space<vmem>>, vector<1x8xf32>
    %99 = vector.broadcast %98 : vector<1x8xf32> to vector<64x8xf32>
    %100 = arith.mulf %97, %99 : vector<64x8xf32>
    %c0_154 = arith.constant 0 : index
    %c0_155 = arith.constant 0 : index
    %101 = vector.load %arg7[%c0_154, %c0_155] : memref<1x8xf32, #tpu.memory_space<vmem>>, vector<1x8xf32>
    %102 = vector.broadcast %101 : vector<1x8xf32> to vector<64x8xf32>
    %103 = arith.addf %100, %102 : vector<64x8xf32>
    %cst_156 = arith.constant 0.000000e+00 : f32
    %104 = vector.broadcast %cst_156 : f32 to vector<64x8xf32>
    %105 = arith.maximumf %103, %104 : vector<64x8xf32>
    %c0_157 = arith.constant 0 : index
    %c0_158 = arith.constant 0 : index
    %c0_159 = arith.constant 0 : index
    %106 = vector.load %arg8[%c0_157, %c0_158, %c0_159] : memref<1x64x8xf32, #tpu.memory_space<vmem>>, vector<1x64x8xf32>
    %107 = vector.shape_cast %106 : vector<1x64x8xf32> to vector<64x8xf32>
    %108 = vector.shape_cast %105 : vector<64x8xf32> to vector<1x64x8xf32>
    tpu.vector_store %arg8[%c0_157, %c0_158, %c0_159], %108 {strides = array<i32>} : memref<1x64x8xf32, #tpu.memory_space<vmem>>, vector<1x64x8xf32>,
    return
  }
  func.func @transform_0(%arg0: i32) -> (i32, i32, i32, i32, i32) {
    %c0_i32 = arith.constant 0 : i32
    %c0_i32_0 = arith.constant 0 : i32
    %c0_i32_1 = arith.constant 0 : i32
    %c0_i32_2 = arith.constant 0 : i32
    %c0_i32_3 = arith.constant 0 : i32
    return %arg0, %c0_i32, %c0_i32_0, %c0_i32_1, %c0_i32_2 : i32, i32, i32, i32, i32
  }
  func.func @transform_1(%arg0: i32) -> (i32, i32) {
    %c0_i32 = arith.constant 0 : i32
    %c0_i32_0 = arith.constant 0 : i32
    %c0_i32_1 = arith.constant 0 : i32
    return %c0_i32, %c0_i32_0 : i32, i32
  }
  func.func @transform_2(%arg0: i32) -> (i32, i32) {
    %c0_i32 = arith.constant 0 : i32
    %c0_i32_0 = arith.constant 0 : i32
    %c0_i32_1 = arith.constant 0 : i32
    return %c0_i32, %c0_i32_0 : i32, i32
  }
  func.func @transform_3(%arg0: i32) -> (i32, i32) {
    %c0_i32 = arith.constant 0 : i32
    %c0_i32_0 = arith.constant 0 : i32
    %c0_i32_1 = arith.constant 0 : i32
    return %c0_i32, %c0_i32_0 : i32, i32
  }
  func.func @transform_4(%arg0: i32) -> (i32, i32) {
    %c0_i32 = arith.constant 0 : i32
    %c0_i32_0 = arith.constant 0 : i32
    %c0_i32_1 = arith.constant 0 : i32
    return %c0_i32, %c0_i32_0 : i32, i32
  }
  func.func @transform_5(%arg0: i32) -> (i32, i32) {
    %c0_i32 = arith.constant 0 : i32
    %c0_i32_0 = arith.constant 0 : i32
    %c0_i32_1 = arith.constant 0 : i32
    return %c0_i32, %c0_i32_0 : i32, i32
  }
  func.func @transform_6(%arg0: i32) -> (i32, i32) {
    %c0_i32 = arith.constant 0 : i32
    %c0_i32_0 = arith.constant 0 : i32
    %c0_i32_1 = arith.constant 0 : i32
    return %c0_i32, %c0_i32_0 : i32, i32
  }
  func.func @transform_7(%arg0: i32) -> (i32, i32, i32) {
    %c0_i32 = arith.constant 0 : i32
    %c0_i32_0 = arith.constant 0 : i32
    %c0_i32_1 = arith.constant 0 : i32
    return %arg0, %c0_i32, %c0_i32_0 : i32, i32, i32
  }
}

</mosaic_0001>

<llo_original>
// kernel: tpu_custom_call.1
$region0: #{tpu_custom_call.1}
  #allocation0 [shape = 'u32[]', space=smem, size = 0x4, offset = 0x4, fixed_abs, tag = 'smem constant byte address 0x4 - core index']
  #allocation1 [shape = 'u32[144,128]{1,0:T(1,128)}', space=vmem, size = 0x12000, scoped, tag = 'internal scratch']
  #allocation2 [shape = 'f32[10,10,4]{2,1,0:T(8,128)}', space=vmem, size = 0x14000, scoped, tag = 'scratch operand']
  #allocation3 [shape = 'f32[10,10,8]{2,1,0:T(8,128)}', space=vmem, size = 0x14000, scoped, tag = 'scratch operand']
  #allocation4 [shape = 'bf16[8,8,36]{2,1,0:T(8,128)(2,1)}', space=vmem, size = 0x4000, scoped, tag = 'scratch operand']
  #allocation5 [shape = 'bf16[8,8,72]{2,1,0:T(8,128)(2,1)}', space=vmem, size = 0x4000, scoped, tag = 'scratch operand']
  %s0 = inlined_call_operand.vmem [shape: f32[2,16,2,8,4], index: 0, kind: input, shape index: {}]
  %s1 = inlined_call_operand.vmem [shape: bf16[36,8], index: 1, kind: input, shape index: {}]
  %s2 = inlined_call_operand.vmem [shape: bf16[72,8], index: 2, kind: input, shape index: {}]
  %s3 = inlined_call_operand.vmem [shape: f32[1,8], index: 3, kind: input, shape index: {}]
  %s4 = inlined_call_operand.vmem [shape: f32[1,8], index: 4, kind: input, shape index: {}]
  %s5 = inlined_call_operand.vmem [shape: f32[1,8], index: 5, kind: input, shape index: {}]
  %s6 = inlined_call_operand.vmem [shape: f32[1,8], index: 6, kind: input, shape index: {}]
  %s7 = inlined_call_operand.vmem [shape: f32[2,64,8], index: 7, kind: output, shape index: {}]
  %s8 = sld [smem:[#allocation0]]
  $region61: #{tpu_custom_call.1} parent=0
    _
  %s10 = ssub.s32 1, %s8
  %s11 = scalar_select 0, %s10, %s8
  loop: start=0, step=1, limit=4
  $region2: #{tpu_custom_call.1} parent=0 // loop_pre_header
    _
  $region3: #{tpu_custom_call.1} parent=0 // loop_header
    %s13 = sphi 0, %s17
    %p14 = scmp.ge.s32.totalorder %s13, 4
    %s23 = sphi 0, %s25
    %s26 = sphi 0, %s23
    %s27 = sphi 0, %s26
    %s43 = sphi 0, %s27
    %s47 = sphi 0, %s47
    %s49 = sphi 0, %s47
    %s50 = sphi 0, %s49
    %s64 = sphi 0, %s50
    %s68 = sphi 0, %s68
    %s70 = sphi 0, %s68
    %s71 = sphi 0, %s70
    %s85 = sphi 0, %s71
    %s89 = sphi 0, %s89
    %s91 = sphi 0, %s89
    %s92 = sphi 0, %s91
    %s106 = sphi 0, %s92
    %s110 = sphi 0, %s110
    %s112 = sphi 0, %s110
    %s113 = sphi 0, %s112
    %s127 = sphi 0, %s113
    %s131 = sphi 0, %s131
    %s133 = sphi 0, %s131
    %s134 = sphi 0, %s133
    %s148 = sphi 0, %s134
    %s152 = sphi 0, %s152
    %s154 = sphi 0, %s152
    %s155 = sphi 0, %s154
    %s169 = sphi 0, %s155
    %s175 = sphi 0, %s177
    %s178 = sphi 0, %s175
    %s179 = sphi 0, %s178
    %s195 = sphi 0, %s179
  $region4: #{tpu_custom_call.1} parent=0 // loop_header_branch
    %16 = sbr.rel (%p14) target = $region8
  $region5: #{tpu_custom_call.1} parent=0 // loop_body
    %s18 = ssub.s32 %s13, 1
    %s19 = ssub.s32 %s13, 2
    %s20 = sadd.s32 %s13, 1
    %s21 = ssub.s32 %s13, %s20
    %p22 = scmp.eq.s32.totalorder %s21, 0
    %s24 = sadd.s32 %s23, 1
    %s25 = scalar_select %p22, %s23, %s24
    %p28 = pneg %p22
    %p29 = scmp.eq.s32.totalorder %s13, 1
    %p30 = por %p28, %p29
    %p31 = scmp.ne.s32.totalorder %s23, %s26
    %p32 = scmp.eq.s32.totalorder %s13, 0
    %p33 = por %p31, %p32
    %p34 = scmp.ne.s32.totalorder %s23, %s26
    %p35 = scmp.eq.s32.totalorder %s18, 1
    %p36 = por %p34, %p35
    %p37 = scmp.ne.s32.totalorder %s26, %s27
    %p38 = scmp.eq.s32.totalorder %s18, 0
    %p39 = por %p37, %p38
    %p40 = scmp.ne.s32.totalorder %s26, %s27
    %p41 = scmp.eq.s32.totalorder %s19, 1
    %p42 = por %p40, %p41
    %p44 = scmp.ne.s32.totalorder %s27, %s43
    %p45 = scmp.eq.s32.totalorder %s19, 0
    %p46 = por %p44, %p45
    %s48 = sadd.s32 %s47, 1
    %p51 = scmp.eq.s32.totalorder %s13, 1
    %p52 = scmp.ne.s32.totalorder %s47, %s49
    %p53 = scmp.eq.s32.totalorder %s13, 0
    %p54 = por %p52, %p53
    %p55 = scmp.ne.s32.totalorder %s47, %s49
    %p56 = scmp.eq.s32.totalorder %s18, 1
    %p57 = por %p55, %p56
    %p58 = scmp.ne.s32.totalorder %s49, %s50
    %p59 = scmp.eq.s32.totalorder %s18, 0
    %p60 = por %p58, %p59
    %p61 = scmp.ne.s32.totalorder %s49, %s50
    %p62 = scmp.eq.s32.totalorder %s19, 1
    %p63 = por %p61, %p62
    %p65 = scmp.ne.s32.totalorder %s50, %s64
    %p66 = scmp.eq.s32.totalorder %s19, 0
    %p67 = por %p65, %p66
    %s69 = sadd.s32 %s68, 1
    %p72 = scmp.eq.s32.totalorder %s13, 1
    %p73 = scmp.ne.s32.totalorder %s68, %s70
    %p74 = scmp.eq.s32.totalorder %s13, 0
    %p75 = por %p73, %p74
    %p76 = scmp.ne.s32.totalorder %s68, %s70
    %p77 = scmp.eq.s32.totalorder %s18, 1
    %p78 = por %p76, %p77
    %p79 = scmp.ne.s32.totalorder %s70, %s71
    %p80 = scmp.eq.s32.totalorder %s18, 0
    %p81 = por %p79, %p80
    %p82 = scmp.ne.s32.totalorder %s70, %s71
    %p83 = scmp.eq.s32.totalorder %s19, 1
    %p84 = por %p82, %p83
    %p86 = scmp.ne.s32.totalorder %s71, %s85
    %p87 = scmp.eq.s32.totalorder %s19, 0
    %p88 = por %p86, %p87
    %s90 = sadd.s32 %s89, 1
    %p93 = scmp.eq.s32.totalorder %s13, 1
    %p94 = scmp.ne.s32.totalorder %s89, %s91
    %p95 = scmp.eq.s32.totalorder %s13, 0
    %p96 = por %p94, %p95
    %p97 = scmp.ne.s32.totalorder %s89, %s91
    %p98 = scmp.eq.s32.totalorder %s18, 1
    %p99 = por %p97, %p98
    %p100 = scmp.ne.s32.totalorder %s91, %s92
    %p101 = scmp.eq.s32.totalorder %s18, 0
    %p102 = por %p100, %p101
    %p103 = scmp.ne.s32.totalorder %s91, %s92
    %p104 = scmp.eq.s32.totalorder %s19, 1
    %p105 = por %p103, %p104
    %p107 = scmp.ne.s32.totalorder %s92, %s106
    %p108 = scmp.eq.s32.totalorder %s19, 0
    %p109 = por %p107, %p108
    %s111 = sadd.s32 %s110, 1
    %p114 = scmp.eq.s32.totalorder %s13, 1
    %p115 = scmp.ne.s32.totalorder %s110, %s112
    %p116 = scmp.eq.s32.totalorder %s13, 0
    %p117 = por %p115, %p116
    %p118 = scmp.ne.s32.totalorder %s110, %s112
    %p119 = scmp.eq.s32.totalorder %s18, 1
    %p120 = por %p118, %p119
    %p121 = scmp.ne.s32.totalorder %s112, %s113
    %p122 = scmp.eq.s32.totalorder %s18, 0
    %p123 = por %p121, %p122
    %p124 = scmp.ne.s32.totalorder %s112, %s113
    %p125 = scmp.eq.s32.totalorder %s19, 1
    %p126 = por %p124, %p125
    %p128 = scmp.ne.s32.totalorder %s113, %s127
    %p129 = scmp.eq.s32.totalorder %s19, 0
    %p130 = por %p128, %p129
    %s132 = sadd.s32 %s131, 1
    %p135 = scmp.eq.s32.totalorder %s13, 1
    %p136 = scmp.ne.s32.totalorder %s131, %s133
    %p137 = scmp.eq.s32.totalorder %s13, 0
    %p138 = por %p136, %p137
    %p139 = scmp.ne.s32.totalorder %s131, %s133
    %p140 = scmp.eq.s32.totalorder %s18, 1
    %p141 = por %p139, %p140
    %p142 = scmp.ne.s32.totalorder %s133, %s134
    %p143 = scmp.eq.s32.totalorder %s18, 0
    %p144 = por %p142, %p143
    %p145 = scmp.ne.s32.totalorder %s133, %s134
    %p146 = scmp.eq.s32.totalorder %s19, 1
    %p147 = por %p145, %p146
    %p149 = scmp.ne.s32.totalorder %s134, %s148
    %p150 = scmp.eq.s32.totalorder %s19, 0
    %p151 = por %p149, %p150
    %s153 = sadd.s32 %s152, 1
    %p156 = scmp.eq.s32.totalorder %s13, 1
    %p157 = scmp.ne.s32.totalorder %s152, %s154
    %p158 = scmp.eq.s32.totalorder %s13, 0
    %p159 = por %p157, %p158
    %p160 = scmp.ne.s32.totalorder %s152, %s154
    %p161 = scmp.eq.s32.totalorder %s18, 1
    %p162 = por %p160, %p161
    %p163 = scmp.ne.s32.totalorder %s154, %s155
    %p164 = scmp.eq.s32.totalorder %s18, 0
    %p165 = por %p163, %p164
    %p166 = scmp.ne.s32.totalorder %s154, %s155
    %p167 = scmp.eq.s32.totalorder %s19, 1
    %p168 = por %p166, %p167
    %p170 = scmp.ne.s32.totalorder %s155, %s169
    %p171 = scmp.eq.s32.totalorder %s19, 0
    %p172 = por %p170, %p171
    %s173 = ssub.s32 %s13, %s20
    %p174 = scmp.eq.s32.totalorder %s173, 0
    %s176 = sadd.s32 %s175, 1
    %s177 = scalar_select %p174, %s175, %s176
    %p180 = pneg %p174
    %p181 = scmp.eq.s32.totalorder %s13, 1
    %p182 = por %p180, %p181
    %p183 = scmp.ne.s32.totalorder %s175, %s178
    %p184 = scmp.eq.s32.totalorder %s13, 0
    %p185 = por %p183, %p184
    %p186 = scmp.ne.s32.totalorder %s175, %s178
    %p187 = scmp.eq.s32.totalorder %s18, 1
    %p188 = por %p186, %p187
    %p189 = scmp.ne.s32.totalorder %s178, %s179
    %p190 = scmp.eq.s32.totalorder %s18, 0
    %p191 = por %p189, %p190
    %p192 = scmp.ne.s32.totalorder %s178, %s179
    %p193 = scmp.eq.s32.totalorder %s19, 1
    %p194 = por %p192, %p193
    %p196 = scmp.ne.s32.totalorder %s179, %s195
    %p197 = scmp.eq.s32.totalorder %s19, 0
    %p198 = por %p196, %p197
    %p199 = scmp.le.s32.totalorder 1, %s13
    %p200 = scmp.lt.s32.totalorder %s13, 3
    %p201 = pnand %p199, %p200
    %p202 = pneg %p201
    // Predicated region
    $region9: #{tpu_custom_call.1} parent=5 // pred_check
      _
    $region10: #{tpu_custom_call.1} parent=5 // pred_check_branch
      %204 = sbr.rel (%p201) target = $region12
    $region11: #{tpu_custom_call.1} parent=5 // pred_region
      %s205 = ssub.s32 %s13, 1
      // Predicated region
      $region13: #{tpu_custom_call.1} parent=11 // pred_check
        %p206 = pneg %p60
      $region14: #{tpu_custom_call.1} parent=11 // pred_check_branch
        %208 = sbr.rel (%p206) target = $region16
      $region15: #{tpu_custom_call.1} parent=11 // pred_region
        _
      $region16: #{tpu_custom_call.1} parent=11 // pred_fallthru
        _
      // Predicated region
      $region17: #{tpu_custom_call.1} parent=11 // pred_check
        %p209 = pneg %p81
      $region18: #{tpu_custom_call.1} parent=11 // pred_check_branch
        %211 = sbr.rel (%p209) target = $region20
      $region19: #{tpu_custom_call.1} parent=11 // pred_region
        _
      $region20: #{tpu_custom_call.1} parent=11 // pred_fallthru
        _
      // Predicated region
      $region21: #{tpu_custom_call.1} parent=11 // pred_check
        %p212 = pneg %p102
      $region22: #{tpu_custom_call.1} parent=11 // pred_check_branch
        %214 = sbr.rel (%p212) target = $region24
      $region23: #{tpu_custom_call.1} parent=11 // pred_region
        _
      $region24: #{tpu_custom_call.1} parent=11 // pred_fallthru
        _
      // Predicated region
      $region25: #{tpu_custom_call.1} parent=11 // pred_check
        %p215 = pneg %p123
      $region26: #{tpu_custom_call.1} parent=11 // pred_check_branch
        %217 = sbr.rel (%p215) target = $region28
      $region27: #{tpu_custom_call.1} parent=11 // pred_region
        _
      $region28: #{tpu_custom_call.1} parent=11 // pred_fallthru
        _
      // Predicated region
      $region29: #{tpu_custom_call.1} parent=11 // pred_check
        %p218 = pneg %p144
      $region30: #{tpu_custom_call.1} parent=11 // pred_check_branch
        %220 = sbr.rel (%p218) target = $region32
      $region31: #{tpu_custom_call.1} parent=11 // pred_region
        _
      $region32: #{tpu_custom_call.1} parent=11 // pred_fallthru
        _
      // Predicated region
      $region33: #{tpu_custom_call.1} parent=11 // pred_check
        %p221 = pneg %p165
      $region34: #{tpu_custom_call.1} parent=11 // pred_check_branch
        %223 = sbr.rel (%p221) target = $region36
      $region35: #{tpu_custom_call.1} parent=11 // pred_region
        _
      $region36: #{tpu_custom_call.1} parent=11 // pred_fallthru
        _
    $region12: #{tpu_custom_call.1} parent=5 // pred_fallthru
      _
    %p224 = scmp.lt.s32.totalorder %s13, 2
    // Predicated region
    $region37: #{tpu_custom_call.1} parent=5 // pred_check
      %p225 = pneg %p224
    $region38: #{tpu_custom_call.1} parent=5 // pred_check_branch
      %227 = sbr.rel (%p225) target = $region40
    $region39: #{tpu_custom_call.1} parent=5 // pred_region
      // Predicated region
      $region41: #{tpu_custom_call.1} parent=39 // pred_check
        %p228 = pneg %p33
      $region42: #{tpu_custom_call.1} parent=39 // pred_check_branch
        %230 = sbr.rel (%p228) target = $region44
      $region43: #{tpu_custom_call.1} parent=39 // pred_region
        %p231 = scmp.lt.s32.totalorder %s13, 1
        %s232 = scalar_select %p231, %s13, 1
        %s233 = smul.addr %s232, 32
        %s234 = smul.addr %s233, 8
        %s235 = scalar_lea.vmem %s0, %s234
      $region44: #{tpu_custom_call.1} parent=39 // pred_fallthru
        _
    $region40: #{tpu_custom_call.1} parent=5 // pred_fallthru
      _
    %p236 = scmp.le.s32.totalorder 1, %s13
    %p237 = scmp.lt.s32.totalorder %s13, 3
    %p238 = pnand %p236, %p237
    %p239 = pneg %p238
    // Predicated region
    $region45: #{tpu_custom_call.1} parent=5 // pred_check
      _
    $region46: #{tpu_custom_call.1} parent=5 // pred_check_branch
      %241 = sbr.rel (%p238) target = $region48
    $region47: #{tpu_custom_call.1} parent=5 // pred_region
      %s242 = ssub.s32 %s13, 1
      %p243 = scmp.lt.s32.totalorder %s18, 1
      %s244 = scalar_select %p243, %s18, 1
      %s245 = smul.addr %s244, 32
      %s246 = smul.addr %s245, 8
      %s247 = scalar_lea.vmem %s0, %s246
      %p248 = pneg %p39
      %p249 = pneg %p36
      %p250 = pneg %p60
      %p251 = pneg %p57
      %p252 = pneg %p81
      %p253 = pneg %p78
      %p254 = pneg %p102
      %p255 = pneg %p99
      %p256 = pneg %p123
      %p257 = pneg %p120
      %p258 = pneg %p144
      %p259 = pneg %p141
      %p260 = pneg %p165
      %p261 = pneg %p162
      %p262 = pneg %p191
      %p263 = pneg %p188
      %p264 = scmp.lt.s32.totalorder %s18, 1
      %s265 = scalar_select %p264, %s18, 1
      %s266 = smul.addr %s265, 8
      %s267 = smul.addr %s266, 8
      %s268 = scalar_lea.vmem %s7, %s267
      %p269 = scmp.lt.s32.totalorder %s18, 1
      %s270 = scalar_select %p269, %s18, 1
      %s271 = smul.addr %s270, 32
      %s272 = smul.addr %s271, 8
      %s273 = scalar_lea.vmem %s0, %s272
      %p274 = scmp.lt.s32.totalorder %s18, 1
      %s275 = scalar_select %p274, %s18, 1
      %s276 = smul.addr %s275, 8
      %s277 = smul.addr %s276, 8
      %s278 = scalar_lea.vmem %s7, %s277
      %v280 = vld [vmem:[%s273] sm:$0xff]
      %v281 = vld [vmem:[%s273 + $0x8] sm:$0xff]
      %v282 = vld [vmem:[%s273 + $0x10] sm:$0xff]
      %v283 = vld [vmem:[%s273 + $0x18] sm:$0xff]
      %v284 = vld [vmem:[%s273 + $0x20] sm:$0xff]
      %v285 = vld [vmem:[%s273 + $0x28] sm:$0xff]
      %v286 = vld [vmem:[%s273 + $0x30] sm:$0xff]
      %v287 = vld [vmem:[%s273 + $0x38] sm:$0xff]
      %v288 = vld [vmem:[%s273 + $0x40] sm:$0xff]
      %v289 = vld [vmem:[%s273 + $0x48] sm:$0xff]
      %v290 = vld [vmem:[%s273 + $0x50] sm:$0xff]
      %v291 = vld [vmem:[%s273 + $0x58] sm:$0xff]
      %v292 = vld [vmem:[%s273 + $0x60] sm:$0xff]
      %v293 = vld [vmem:[%s273 + $0x68] sm:$0xff]
      %v294 = vld [vmem:[%s273 + $0x70] sm:$0xff]
      %v295 = vld [vmem:[%s273 + $0x78] sm:$0xff]
      %v296 = vld [vmem:[%s273 + $0x80] sm:$0xff]
      %v297 = vld [vmem:[%s273 + $0x88] sm:$0xff]
      %v298 = vld [vmem:[%s273 + $0x90] sm:$0xff]
      %v299 = vld [vmem:[%s273 + $0x98] sm:$0xff]
      %v300 = vld [vmem:[%s273 + $0xa0] sm:$0xff]
      %v301 = vld [vmem:[%s273 + $0xa8] sm:$0xff]
      %v302 = vld [vmem:[%s273 + $0xb0] sm:$0xff]
      %v303 = vld [vmem:[%s273 + $0xb8] sm:$0xff]
      %v304 = vld [vmem:[%s273 + $0xc0] sm:$0xff]
      %v305 = vld [vmem:[%s273 + $0xc8] sm:$0xff]
      %v306 = vld [vmem:[%s273 + $0xd0] sm:$0xff]
      %v307 = vld [vmem:[%s273 + $0xd8] sm:$0xff]
      %v308 = vld [vmem:[%s273 + $0xe0] sm:$0xff]
      %v309 = vld [vmem:[%s273 + $0xe8] sm:$0xff]
      %v310 = vld [vmem:[%s273 + $0xf0] sm:$0xff]
      %v311 = vld [vmem:[%s273 + $0xf8] sm:$0xff]
      %v312 = vmax.f32 %v280, %v281
      %v313 = vmax.f32 %v282, %v283
      %v314 = vmax.f32 %v284, %v285
      %v315 = vmax.f32 %v286, %v287
      %v316 = vmax.f32 %v288, %v289
      %v317 = vmax.f32 %v290, %v291
      %v318 = vmax.f32 %v292, %v293
      %v319 = vmax.f32 %v294, %v295
      %v320 = vmax.f32 %v296, %v297
      %v321 = vmax.f32 %v298, %v299
      %v322 = vmax.f32 %v300, %v301
      %v323 = vmax.f32 %v302, %v303
      %v324 = vmax.f32 %v304, %v305
      %v325 = vmax.f32 %v306, %v307
      %v326 = vmax.f32 %v308, %v309
      %v327 = vmax.f32 %v310, %v311
      %vm328 = vcmask 31744
      %v329 = vsel %vm328, %v312, -inf
      %v330 = vsel %vm328, %v313, -inf
      %v331 = vmax.f32 %v329, %v330
      %v332 = vsel %vm328, %v314, -inf
      %v333 = vsel %vm328, %v315, -inf
      %v334 = vmax.f32 %v332, %v333
      %v335 = vsel %vm328, %v316, -inf
      %v336 = vsel %vm328, %v317, -inf
      %v337 = vmax.f32 %v335, %v336
      %v338 = vsel %vm328, %v318, -inf
      %v339 = vsel %vm328, %v319, -inf
      %v340 = vmax.f32 %v338, %v339
      %v341 = vsel %vm328, %v320, -inf
      %v342 = vsel %vm328, %v321, -inf
      %v343 = vmax.f32 %v341, %v342
      %v344 = vsel %vm328, %v322, -inf
      %v345 = vsel %vm328, %v323, -inf
      %v346 = vmax.f32 %v344, %v345
      %v347 = vsel %vm328, %v324, -inf
      %v348 = vsel %vm328, %v325, -inf
      %v349 = vmax.f32 %v347, %v348
      %v350 = vsel %vm328, %v326, -inf
      %v351 = vsel %vm328, %v327, -inf
      %v352 = vmax.f32 %v350, %v351
      %353 = vst.msk [vmem:[#allocation2] sm:$0xff] %vm328, 0.0
      %vm354 = vcmask 25600
      %355 = vst.msk [vmem:[#allocation2 + $0x8] sm:$0x3] %vm354, 0.0
      %s356 = scalar_lea.vmem [#allocation2], 144
      %357 = vst.msk [vmem:[%s356] sm:$0xff] %vm328, 0.0
      %358 = vst.msk [vmem:[%s356 + $0x8] sm:$0x3] %vm354, 0.0
      %vm359 = vcmask 24576
      %360 = vst.msk [vmem:[#allocation2] sm:$0x1] %vm359, 0.0
      %361 = vst.msk [vmem:[#allocation2 + $0x10] sm:$0x1] %vm359, 0.0
      %362 = vst.msk [vmem:[#allocation2 + $0x20] sm:$0x1] %vm359, 0.0
      %363 = vst.msk [vmem:[#allocation2 + $0x30] sm:$0x1] %vm359, 0.0
      %364 = vst.msk [vmem:[#allocation2 + $0x40] sm:$0x1] %vm359, 0.0
      %365 = vst.msk [vmem:[#allocation2 + $0x50] sm:$0x1] %vm359, 0.0
      %366 = vst.msk [vmem:[#allocation2 + $0x60] sm:$0x1] %vm359, 0.0
      %367 = vst.msk [vmem:[#allocation2 + $0x70] sm:$0x1] %vm359, 0.0
      %368 = vst.msk [vmem:[#allocation2 + $0x80] sm:$0x1] %vm359, 0.0
      %369 = vst.msk [vmem:[#allocation2 + $0x90] sm:$0x1] %vm359, 0.0
      %370 = vst.msk [vmem:[#allocation2 + $0x9] sm:$0x1] %vm359, 0.0
      %371 = vst.msk [vmem:[#allocation2 + $0x19] sm:$0x1] %vm359, 0.0
      %372 = vst.msk [vmem:[#allocation2 + $0x29] sm:$0x1] %vm359, 0.0
      %373 = vst.msk [vmem:[#allocation2 + $0x39] sm:$0x1] %vm359, 0.0
      %374 = vst.msk [vmem:[#allocation2 + $0x49] sm:$0x1] %vm359, 0.0
      %375 = vst.msk [vmem:[#allocation2 + $0x59] sm:$0x1] %vm359, 0.0
      %376 = vst.msk [vmem:[#allocation2 + $0x69] sm:$0x1] %vm359, 0.0
      %377 = vst.msk [vmem:[#allocation2 + $0x79] sm:$0x1] %vm359, 0.0
      %378 = vst.msk [vmem:[#allocation2 + $0x89] sm:$0x1] %vm359, 0.0
      %379 = vst.msk [vmem:[#allocation2 + $0x99] sm:$0x1] %vm359, 0.0
      %s380 = scalar_lea.vmem [#allocation2], 16
      %381 = vst.msk [vmem:[%s380 + $0x1] sm:$0xff] %vm328, %v331
      %382 = vst.msk [vmem:[%s380 + $0x11] sm:$0xff] %vm328, %v334
      %383 = vst.msk [vmem:[%s380 + $0x21] sm:$0xff] %vm328, %v337
      %384 = vst.msk [vmem:[%s380 + $0x31] sm:$0xff] %vm328, %v340
      %385 = vst.msk [vmem:[%s380 + $0x41] sm:$0xff] %vm328, %v343
      %386 = vst.msk [vmem:[%s380 + $0x51] sm:$0xff] %vm328, %v346
      %387 = vst.msk [vmem:[%s380 + $0x61] sm:$0xff] %vm328, %v349
      %388 = vst.msk [vmem:[%s380 + $0x71] sm:$0xff] %vm328, %v352
      %v389 = vld [vmem:[#allocation2] sm:$0xff]
      %v390 = vld [vmem:[#allocation2 + $0x10] sm:$0xff]
      %v391 = vld [vmem:[#allocation2 + $0x20] sm:$0xff]
      %v392 = vld [vmem:[#allocation2 + $0x30] sm:$0xff]
      %v393 = vld [vmem:[#allocation2 + $0x40] sm:$0xff]
      %v394 = vld [vmem:[#allocation2 + $0x50] sm:$0xff]
      %v395 = vld [vmem:[#allocation2 + $0x60] sm:$0xff]
      %v396 = vld [vmem:[#allocation2 + $0x70] sm:$0xff]
      %v397 = vpack.c.bf16 %v389, %v389
      %v398 = vpack.c.bf16 %v390, %v390
      %v399 = vpack.c.bf16 %v391, %v391
      %v400 = vpack.c.bf16 %v392, %v392
      %v401 = vpack.c.bf16 %v393, %v393
      %v402 = vpack.c.bf16 %v394, %v394
      %v403 = vpack.c.bf16 %v395, %v395
      %v404 = vpack.c.bf16 %v396, %v396
      %vm405 = vcmask 27648
      %406 = vst.msk [vmem:[#allocation4] sm:$0xf] %vm405, %v397
      %407 = vst.msk [vmem:[#allocation4 + $0x4] sm:$0xf] %vm405, %v398
      %408 = vst.msk [vmem:[#allocation4 + $0x8] sm:$0xf] %vm405, %v399
      %409 = vst.msk [vmem:[#allocation4 + $0xc] sm:$0xf] %vm405, %v400
      %410 = vst.msk [vmem:[#allocation4 + $0x10] sm:$0xf] %vm405, %v401
      %411 = vst.msk [vmem:[#allocation4 + $0x14] sm:$0xf] %vm405, %v402
      %412 = vst.msk [vmem:[#allocation4 + $0x18] sm:$0xf] %vm405, %v403
      %413 = vst.msk [vmem:[#allocation4 + $0x1c] sm:$0xf] %vm405, %v404
      %v414 = vld [vmem:[#allocation2 + $0x1] sm:$0xff]
      %v415 = vld [vmem:[#allocation2 + $0x11] sm:$0xff]
      %v416 = vld [vmem:[#allocation2 + $0x21] sm:$0xff]
      %v417 = vld [vmem:[#allocation2 + $0x31] sm:$0xff]
      %v418 = vld [vmem:[#allocation2 + $0x41] sm:$0xff]
      %v419 = vld [vmem:[#allocation2 + $0x51] sm:$0xff]
      %v420 = vld [vmem:[#allocation2 + $0x61] sm:$0xff]
      %v421 = vld [vmem:[#allocation2 + $0x71] sm:$0xff]
      %v422 = vpack.c.bf16 %v414, %v414
      %v423 = vpack.c.bf16 %v415, %v415
      %v424 = vpack.c.bf16 %v416, %v416
      %v425 = vpack.c.bf16 %v417, %v417
      %v426 = vpack.c.bf16 %v418, %v418
      %v427 = vpack.c.bf16 %v419, %v419
      %v428 = vpack.c.bf16 %v420, %v420
      %v429 = vpack.c.bf16 %v421, %v421
      %v438 = vunpack.c.l.b16 %v422
      %v439 = vunpack.c.l.b16 %v423
      %v440 = vunpack.c.l.b16 %v424
      %v441 = vunpack.c.l.b16 %v425
      %v442 = vunpack.c.l.b16 %v426
      %v443 = vunpack.c.l.b16 %v427
      %v444 = vunpack.c.l.b16 %v428
      %v445 = vunpack.c.l.b16 %v429
      %v446 = vpack.c.b16 %v438, %v438
      %v447 = vpack.c.b16 %v439, %v439
      %v448 = vpack.c.b16 %v440, %v440
      %v449 = vpack.c.b16 %v441, %v441
      %v450 = vpack.c.b16 %v442, %v442
      %v451 = vpack.c.b16 %v443, %v443
      %v452 = vpack.c.b16 %v444, %v444
      %v453 = vpack.c.b16 %v445, %v445
      %454 = vrot.lane.b32.xlu0 %v446, 4
      %v455 = vpop.permute.xlu0 %454
      %456 = vrot.lane.b32.xlu0 %v447, 4
      %v457 = vpop.permute.xlu0 %456
      %458 = vrot.lane.b32.xlu0 %v448, 4
      %v459 = vpop.permute.xlu0 %458
      %460 = vrot.lane.b32.xlu0 %v449, 4
      %v461 = vpop.permute.xlu0 %460
      %462 = vrot.lane.b32.xlu0 %v450, 4
      %v463 = vpop.permute.xlu0 %462
      %464 = vrot.lane.b32.xlu0 %v451, 4
      %v465 = vpop.permute.xlu0 %464
      %466 = vrot.lane.b32.xlu0 %v452, 4
      %v467 = vpop.permute.xlu0 %466
      %468 = vrot.lane.b32.xlu0 %v453, 4
      %v469 = vpop.permute.xlu0 %468
      %vm478 = vcmask 60448
      %479 = vst.msk [vmem:[#allocation4] sm:$0xf] %vm478, %v455
      %480 = vst.msk [vmem:[#allocation4 + $0x4] sm:$0xf] %vm478, %v457
      %481 = vst.msk [vmem:[#allocation4 + $0x8] sm:$0xf] %vm478, %v459
      %482 = vst.msk [vmem:[#allocation4 + $0xc] sm:$0xf] %vm478, %v461
      %483 = vst.msk [vmem:[#allocation4 + $0x10] sm:$0xf] %vm478, %v463
      %484 = vst.msk [vmem:[#allocation4 + $0x14] sm:$0xf] %vm478, %v465
      %485 = vst.msk [vmem:[#allocation4 + $0x18] sm:$0xf] %vm478, %v467
      %486 = vst.msk [vmem:[#allocation4 + $0x1c] sm:$0xf] %vm478, %v469
      %v487 = vld [vmem:[#allocation2 + $0x2] sm:$0xff]
      %v488 = vld [vmem:[#allocation2 + $0x12] sm:$0xff]
      %v489 = vld [vmem:[#allocation2 + $0x22] sm:$0xff]
      %v490 = vld [vmem:[#allocation2 + $0x32] sm:$0xff]
      %v491 = vld [vmem:[#allocation2 + $0x42] sm:$0xff]
      %v492 = vld [vmem:[#allocation2 + $0x52] sm:$0xff]
      %v493 = vld [vmem:[#allocation2 + $0x62] sm:$0xff]
      %v494 = vld [vmem:[#allocation2 + $0x72] sm:$0xff]
      %v495 = vpack.c.bf16 %v487, %v487
      %v496 = vpack.c.bf16 %v488, %v488
      %v497 = vpack.c.bf16 %v489, %v489
      %v498 = vpack.c.bf16 %v490, %v490
      %v499 = vpack.c.bf16 %v491, %v491
      %v500 = vpack.c.bf16 %v492, %v492
      %v501 = vpack.c.bf16 %v493, %v493
      %v502 = vpack.c.bf16 %v494, %v494
      %v511 = vunpack.c.l.b16 %v495
      %v512 = vunpack.c.l.b16 %v496
      %v513 = vunpack.c.l.b16 %v497
      %v514 = vunpack.c.l.b16 %v498
      %v515 = vunpack.c.l.b16 %v499
      %v516 = vunpack.c.l.b16 %v500
      %v517 = vunpack.c.l.b16 %v501
      %v518 = vunpack.c.l.b16 %v502
      %v519 = vpack.c.b16 %v511, %v511
      %v520 = vpack.c.b16 %v512, %v512
      %v521 = vpack.c.b16 %v513, %v513
      %v522 = vpack.c.b16 %v514, %v514
      %v523 = vpack.c.b16 %v515, %v515
      %v524 = vpack.c.b16 %v516, %v516
      %v525 = vpack.c.b16 %v517, %v517
      %v526 = vpack.c.b16 %v518, %v518
      %527 = vrot.lane.b32.xlu0 %v519, 8
      %v528 = vpop.permute.xlu0 %527
      %529 = vrot.lane.b32.xlu0 %v520, 8
      %v530 = vpop.permute.xlu0 %529
      %531 = vrot.lane.b32.xlu0 %v521, 8
      %v532 = vpop.permute.xlu0 %531
      %533 = vrot.lane.b32.xlu0 %v522, 8
      %v534 = vpop.permute.xlu0 %533
      %535 = vrot.lane.b32.xlu0 %v523, 8
      %v536 = vpop.permute.xlu0 %535
      %537 = vrot.lane.b32.xlu0 %v524, 8
      %v538 = vpop.permute.xlu0 %537
      %539 = vrot.lane.b32.xlu0 %v525, 8
      %v540 = vpop.permute.xlu0 %539
      %541 = vrot.lane.b32.xlu0 %v526, 8
      %v542 = vpop.permute.xlu0 %541
      %vm551 = vcmask 93248
      %552 = vst.msk [vmem:[#allocation4] sm:$0xf] %vm551, %v528
      %553 = vst.msk [vmem:[#allocation4 + $0x4] sm:$0xf] %vm551, %v530
      %554 = vst.msk [vmem:[#allocation4 + $0x8] sm:$0xf] %vm551, %v532
      %555 = vst.msk [vmem:[#allocation4 + $0xc] sm:$0xf] %vm551, %v534
      %556 = vst.msk [vmem:[#allocation4 + $0x10] sm:$0xf] %vm551, %v536
      %557 = vst.msk [vmem:[#allocation4 + $0x14] sm:$0xf] %vm551, %v538
      %558 = vst.msk [vmem:[#allocation4 + $0x18] sm:$0xf] %vm551, %v540
      %559 = vst.msk [vmem:[#allocation4 + $0x1c] sm:$0xf] %vm551, %v542
      %v560 = vld [vmem:[%s380] sm:$0xff]
      %v561 = vld [vmem:[%s380 + $0x10] sm:$0xff]
      %v562 = vld [vmem:[%s380 + $0x20] sm:$0xff]
      %v563 = vld [vmem:[%s380 + $0x30] sm:$0xff]
      %v564 = vld [vmem:[%s380 + $0x40] sm:$0xff]
      %v565 = vld [vmem:[%s380 + $0x50] sm:$0xff]
      %v566 = vld [vmem:[%s380 + $0x60] sm:$0xff]
      %v567 = vld [vmem:[%s380 + $0x70] sm:$0xff]
      %v568 = vpack.c.bf16 %v560, %v560
      %v569 = vpack.c.bf16 %v561, %v561
      %v570 = vpack.c.bf16 %v562, %v562
      %v571 = vpack.c.bf16 %v563, %v563
      %v572 = vpack.c.bf16 %v564, %v564
      %v573 = vpack.c.bf16 %v565, %v565
      %v574 = vpack.c.bf16 %v566, %v566
      %v575 = vpack.c.bf16 %v567, %v567
      %v584 = vunpack.c.l.b16 %v568
      %v585 = vunpack.c.l.b16 %v569
      %v586 = vunpack.c.l.b16 %v570
      %v587 = vunpack.c.l.b16 %v571
      %v588 = vunpack.c.l.b16 %v572
      %v589 = vunpack.c.l.b16 %v573
      %v590 = vunpack.c.l.b16 %v574
      %v591 = vunpack.c.l.b16 %v575
      %v592 = vpack.c.b16 %v584, %v584
      %v593 = vpack.c.b16 %v585, %v585
      %v594 = vpack.c.b16 %v586, %v586
      %v595 = vpack.c.b16 %v587, %v587
      %v596 = vpack.c.b16 %v588, %v588
      %v597 = vpack.c.b16 %v589, %v589
      %v598 = vpack.c.b16 %v590, %v590
      %v599 = vpack.c.b16 %v591, %v591
      %600 = vrot.lane.b32.xlu0 %v592, 12
      %v601 = vpop.permute.xlu0 %600
      %602 = vrot.lane.b32.xlu0 %v593, 12
      %v603 = vpop.permute.xlu0 %602
      %604 = vrot.lane.b32.xlu0 %v594, 12
      %v605 = vpop.permute.xlu0 %604
      %606 = vrot.lane.b32.xlu0 %v595, 12
      %v607 = vpop.permute.xlu0 %606
      %608 = vrot.lane.b32.xlu0 %v596, 12
      %v609 = vpop.permute.xlu0 %608
      %610 = vrot.lane.b32.xlu0 %v597, 12
      %v611 = vpop.permute.xlu0 %610
      %612 = vrot.lane.b32.xlu0 %v598, 12
      %v613 = vpop.permute.xlu0 %612
      %614 = vrot.lane.b32.xlu0 %v599, 12
      %v615 = vpop.permute.xlu0 %614
      %vm624 = vcmask 126048
      %625 = vst.msk [vmem:[#allocation4] sm:$0xf] %vm624, %v601
      %626 = vst.msk [vmem:[#allocation4 + $0x4] sm:$0xf] %vm624, %v603
      %627 = vst.msk [vmem:[#allocation4 + $0x8] sm:$0xf] %vm624, %v605
      %628 = vst.msk [vmem:[#allocation4 + $0xc] sm:$0xf] %vm624, %v607
      %629 = vst.msk [vmem:[#allocation4 + $0x10] sm:$0xf] %vm624, %v609
      %630 = vst.msk [vmem:[#allocation4 + $0x14] sm:$0xf] %vm624, %v611
      %631 = vst.msk [vmem:[#allocation4 + $0x18] sm:$0xf] %vm624, %v613
      %632 = vst.msk [vmem:[#allocation4 + $0x1c] sm:$0xf] %vm624, %v615
      %v633 = vld [vmem:[%s380 + $0x1] sm:$0xff]
      %v634 = vld [vmem:[%s380 + $0x11] sm:$0xff]
      %v635 = vld [vmem:[%s380 + $0x21] sm:$0xff]
      %v636 = vld [vmem:[%s380 + $0x31] sm:$0xff]
      %v637 = vld [vmem:[%s380 + $0x41] sm:$0xff]
      %v638 = vld [vmem:[%s380 + $0x51] sm:$0xff]
      %v639 = vld [vmem:[%s380 + $0x61] sm:$0xff]
      %v640 = vld [vmem:[%s380 + $0x71] sm:$0xff]
      %v641 = vpack.c.bf16 %v633, %v633
      %v642 = vpack.c.bf16 %v634, %v634
      %v643 = vpack.c.bf16 %v635, %v635
      %v644 = vpack.c.bf16 %v636, %v636
      %v645 = vpack.c.bf16 %v637, %v637
      %v646 = vpack.c.bf16 %v638, %v638
      %v647 = vpack.c.bf16 %v639, %v639
      %v648 = vpack.c.bf16 %v640, %v640
      %v657 = vunpack.c.l.b16 %v641
      %v658 = vunpack.c.l.b16 %v642
      %v659 = vunpack.c.l.b16 %v643
      %v660 = vunpack.c.l.b16 %v644
      %v661 = vunpack.c.l.b16 %v645
      %v662 = vunpack.c.l.b16 %v646
      %v663 = vunpack.c.l.b16 %v647
      %v664 = vunpack.c.l.b16 %v648
      %v665 = vpack.c.b16 %v657, %v657
      %v666 = vpack.c.b16 %v658, %v658
      %v667 = vpack.c.b16 %v659, %v659
      %v668 = vpack.c.b16 %v660, %v660
      %v669 = vpack.c.b16 %v661, %v661
      %v670 = vpack.c.b16 %v662, %v662
      %v671 = vpack.c.b16 %v663, %v663
      %v672 = vpack.c.b16 %v664, %v664
      %673 = vrot.lane.b32.xlu0 %v665, 16
      %v674 = vpop.permute.xlu0 %673
      %675 = vrot.lane.b32.xlu0 %v666, 16
      %v676 = vpop.permute.xlu0 %675
      %677 = vrot.lane.b32.xlu0 %v667, 16
      %v678 = vpop.permute.xlu0 %677
      %679 = vrot.lane.b32.xlu0 %v668, 16
      %v680 = vpop.permute.xlu0 %679
      %681 = vrot.lane.b32.xlu0 %v669, 16
      %v682 = vpop.permute.xlu0 %681
      %683 = vrot.lane.b32.xlu0 %v670, 16
      %v684 = vpop.permute.xlu0 %683
      %685 = vrot.lane.b32.xlu0 %v671, 16
      %v686 = vpop.permute.xlu0 %685
      %687 = vrot.lane.b32.xlu0 %v672, 16
      %v688 = vpop.permute.xlu0 %687
      %vm697 = vcmask 158848
      %698 = vst.msk [vmem:[#allocation4] sm:$0xf] %vm697, %v674
      %699 = vst.msk [vmem:[#allocation4 + $0x4] sm:$0xf] %vm697, %v676
      %700 = vst.msk [vmem:[#allocation4 + $0x8] sm:$0xf] %vm697, %v678
      %701 = vst.msk [vmem:[#allocation4 + $0xc] sm:$0xf] %vm697, %v680
      %702 = vst.msk [vmem:[#allocation4 + $0x10] sm:$0xf] %vm697, %v682
      %703 = vst.msk [vmem:[#allocation4 + $0x14] sm:$0xf] %vm697, %v684
      %704 = vst.msk [vmem:[#allocation4 + $0x18] sm:$0xf] %vm697, %v686
      %705 = vst.msk [vmem:[#allocation4 + $0x1c] sm:$0xf] %vm697, %v688
      %v706 = vld [vmem:[%s380 + $0x2] sm:$0xff]
      %v707 = vld [vmem:[%s380 + $0x12] sm:$0xff]
      %v708 = vld [vmem:[%s380 + $0x22] sm:$0xff]
      %v709 = vld [vmem:[%s380 + $0x32] sm:$0xff]
      %v710 = vld [vmem:[%s380 + $0x42] sm:$0xff]
      %v711 = vld [vmem:[%s380 + $0x52] sm:$0xff]
      %v712 = vld [vmem:[%s380 + $0x62] sm:$0xff]
      %v713 = vld [vmem:[%s380 + $0x72] sm:$0xff]
      %v714 = vpack.c.bf16 %v706, %v706
      %v715 = vpack.c.bf16 %v707, %v707
      %v716 = vpack.c.bf16 %v708, %v708
      %v717 = vpack.c.bf16 %v709, %v709
      %v718 = vpack.c.bf16 %v710, %v710
      %v719 = vpack.c.bf16 %v711, %v711
      %v720 = vpack.c.bf16 %v712, %v712
      %v721 = vpack.c.bf16 %v713, %v713
      %v730 = vunpack.c.l.b16 %v714
      %v731 = vunpack.c.l.b16 %v715
      %v732 = vunpack.c.l.b16 %v716
      %v733 = vunpack.c.l.b16 %v717
      %v734 = vunpack.c.l.b16 %v718
      %v735 = vunpack.c.l.b16 %v719
      %v736 = vunpack.c.l.b16 %v720
      %v737 = vunpack.c.l.b16 %v721
      %v738 = vpack.c.b16 %v730, %v730
      %v739 = vpack.c.b16 %v731, %v731
      %v740 = vpack.c.b16 %v732, %v732
      %v741 = vpack.c.b16 %v733, %v733
      %v742 = vpack.c.b16 %v734, %v734
      %v743 = vpack.c.b16 %v735, %v735
      %v744 = vpack.c.b16 %v736, %v736
      %v745 = vpack.c.b16 %v737, %v737
      %746 = vrot.lane.b32.xlu0 %v738, 20
      %v747 = vpop.permute.xlu0 %746
      %748 = vrot.lane.b32.xlu0 %v739, 20
      %v749 = vpop.permute.xlu0 %748
      %750 = vrot.lane.b32.xlu0 %v740, 20
      %v751 = vpop.permute.xlu0 %750
      %752 = vrot.lane.b32.xlu0 %v741, 20
      %v753 = vpop.permute.xlu0 %752
      %754 = vrot.lane.b32.xlu0 %v742, 20
      %v755 = vpop.permute.xlu0 %754
      %756 = vrot.lane.b32.xlu0 %v743, 20
      %v757 = vpop.permute.xlu0 %756
      %758 = vrot.lane.b32.xlu0 %v744, 20
      %v759 = vpop.permute.xlu0 %758
      %760 = vrot.lane.b32.xlu0 %v745, 20
      %v761 = vpop.permute.xlu0 %760
      %vm770 = vcmask 191648
      %771 = vst.msk [vmem:[#allocation4] sm:$0xf] %vm770, %v747
      %772 = vst.msk [vmem:[#allocation4 + $0x4] sm:$0xf] %vm770, %v749
      %773 = vst.msk [vmem:[#allocation4 + $0x8] sm:$0xf] %vm770, %v751
      %774 = vst.msk [vmem:[#allocation4 + $0xc] sm:$0xf] %vm770, %v753
      %775 = vst.msk [vmem:[#allocation4 + $0x10] sm:$0xf] %vm770, %v755
      %776 = vst.msk [vmem:[#allocation4 + $0x14] sm:$0xf] %vm770, %v757
      %777 = vst.msk [vmem:[#allocation4 + $0x18] sm:$0xf] %vm770, %v759
      %778 = vst.msk [vmem:[#allocation4 + $0x1c] sm:$0xf] %vm770, %v761
      %s779 = scalar_lea.vmem [#allocation2], 32
      %v780 = vld [vmem:[%s779] sm:$0xff]
      %v781 = vld [vmem:[%s779 + $0x10] sm:$0xff]
      %v782 = vld [vmem:[%s779 + $0x20] sm:$0xff]
      %v783 = vld [vmem:[%s779 + $0x30] sm:$0xff]
      %v784 = vld [vmem:[%s779 + $0x40] sm:$0xff]
      %v785 = vld [vmem:[%s779 + $0x50] sm:$0xff]
      %v786 = vld [vmem:[%s779 + $0x60] sm:$0xff]
      %v787 = vld [vmem:[%s779 + $0x70] sm:$0xff]
      %v788 = vpack.c.bf16 %v780, %v780
      %v789 = vpack.c.bf16 %v781, %v781
      %v790 = vpack.c.bf16 %v782, %v782
      %v791 = vpack.c.bf16 %v783, %v783
      %v792 = vpack.c.bf16 %v784, %v784
      %v793 = vpack.c.bf16 %v785, %v785
      %v794 = vpack.c.bf16 %v786, %v786
      %v795 = vpack.c.bf16 %v787, %v787
      %v804 = vunpack.c.l.b16 %v788
      %v805 = vunpack.c.l.b16 %v789
      %v806 = vunpack.c.l.b16 %v790
      %v807 = vunpack.c.l.b16 %v791
      %v808 = vunpack.c.l.b16 %v792
      %v809 = vunpack.c.l.b16 %v793
      %v810 = vunpack.c.l.b16 %v794
      %v811 = vunpack.c.l.b16 %v795
      %v812 = vpack.c.b16 %v804, %v804
      %v813 = vpack.c.b16 %v805, %v805
      %v814 = vpack.c.b16 %v806, %v806
      %v815 = vpack.c.b16 %v807, %v807
      %v816 = vpack.c.b16 %v808, %v808
      %v817 = vpack.c.b16 %v809, %v809
      %v818 = vpack.c.b16 %v810, %v810
      %v819 = vpack.c.b16 %v811, %v811
      %820 = vrot.lane.b32.xlu0 %v812, 24
      %v821 = vpop.permute.xlu0 %820
      %822 = vrot.lane.b32.xlu0 %v813, 24
      %v823 = vpop.permute.xlu0 %822
      %824 = vrot.lane.b32.xlu0 %v814, 24
      %v825 = vpop.permute.xlu0 %824
      %826 = vrot.lane.b32.xlu0 %v815, 24
      %v827 = vpop.permute.xlu0 %826
      %828 = vrot.lane.b32.xlu0 %v816, 24
      %v829 = vpop.permute.xlu0 %828
      %830 = vrot.lane.b32.xlu0 %v817, 24
      %v831 = vpop.permute.xlu0 %830
      %832 = vrot.lane.b32.xlu0 %v818, 24
      %v833 = vpop.permute.xlu0 %832
      %834 = vrot.lane.b32.xlu0 %v819, 24
      %v835 = vpop.permute.xlu0 %834
      %vm844 = vcmask 224448
      %845 = vst.msk [vmem:[#allocation4] sm:$0xf] %vm844, %v821
      %846 = vst.msk [vmem:[#allocation4 + $0x4] sm:$0xf] %vm844, %v823
      %847 = vst.msk [vmem:[#allocation4 + $0x8] sm:$0xf] %vm844, %v825
      %848 = vst.msk [vmem:[#allocation4 + $0xc] sm:$0xf] %vm844, %v827
      %849 = vst.msk [vmem:[#allocation4 + $0x10] sm:$0xf] %vm844, %v829
      %850 = vst.msk [vmem:[#allocation4 + $0x14] sm:$0xf] %vm844, %v831
      %851 = vst.msk [vmem:[#allocation4 + $0x18] sm:$0xf] %vm844, %v833
      %852 = vst.msk [vmem:[#allocation4 + $0x1c] sm:$0xf] %vm844, %v835
      %v853 = vld [vmem:[%s779 + $0x1] sm:$0xff]
      %v854 = vld [vmem:[%s779 + $0x11] sm:$0xff]
      %v855 = vld [vmem:[%s779 + $0x21] sm:$0xff]
      %v856 = vld [vmem:[%s779 + $0x31] sm:$0xff]
      %v857 = vld [vmem:[%s779 + $0x41] sm:$0xff]
      %v858 = vld [vmem:[%s779 + $0x51] sm:$0xff]
      %v859 = vld [vmem:[%s779 + $0x61] sm:$0xff]
      %v860 = vld [vmem:[%s779 + $0x71] sm:$0xff]
      %v861 = vpack.c.bf16 %v853, %v853
      %v862 = vpack.c.bf16 %v854, %v854
      %v863 = vpack.c.bf16 %v855, %v855
      %v864 = vpack.c.bf16 %v856, %v856
      %v865 = vpack.c.bf16 %v857, %v857
      %v866 = vpack.c.bf16 %v858, %v858
      %v867 = vpack.c.bf16 %v859, %v859
      %v868 = vpack.c.bf16 %v860, %v860
      %v877 = vunpack.c.l.b16 %v861
      %v878 = vunpack.c.l.b16 %v862
      %v879 = vunpack.c.l.b16 %v863
      %v880 = vunpack.c.l.b16 %v864
      %v881 = vunpack.c.l.b16 %v865
      %v882 = vunpack.c.l.b16 %v866
      %v883 = vunpack.c.l.b16 %v867
      %v884 = vunpack.c.l.b16 %v868
      %v885 = vpack.c.b16 %v877, %v877
      %v886 = vpack.c.b16 %v878, %v878
      %v887 = vpack.c.b16 %v879, %v879
      %v888 = vpack.c.b16 %v880, %v880
      %v889 = vpack.c.b16 %v881, %v881
      %v890 = vpack.c.b16 %v882, %v882
      %v891 = vpack.c.b16 %v883, %v883
      %v892 = vpack.c.b16 %v884, %v884
      %893 = vrot.lane.b32.xlu0 %v885, 28
      %v894 = vpop.permute.xlu0 %893
      %895 = vrot.lane.b32.xlu0 %v886, 28
      %v896 = vpop.permute.xlu0 %895
      %897 = vrot.lane.b32.xlu0 %v887, 28
      %v898 = vpop.permute.xlu0 %897
      %899 = vrot.lane.b32.xlu0 %v888, 28
      %v900 = vpop.permute.xlu0 %899
      %901 = vrot.lane.b32.xlu0 %v889, 28
      %v902 = vpop.permute.xlu0 %901
      %903 = vrot.lane.b32.xlu0 %v890, 28
      %v904 = vpop.permute.xlu0 %903
      %905 = vrot.lane.b32.xlu0 %v891, 28
      %v906 = vpop.permute.xlu0 %905
      %907 = vrot.lane.b32.xlu0 %v892, 28
      %v908 = vpop.permute.xlu0 %907
      %vm917 = vcmask 257248
      %918 = vst.msk [vmem:[#allocation4] sm:$0xf] %vm917, %v894
      %919 = vst.msk [vmem:[#allocation4 + $0x4] sm:$0xf] %vm917, %v896
      %920 = vst.msk [vmem:[#allocation4 + $0x8] sm:$0xf] %vm917, %v898
      %921 = vst.msk [vmem:[#allocation4 + $0xc] sm:$0xf] %vm917, %v900
      %922 = vst.msk [vmem:[#allocation4 + $0x10] sm:$0xf] %vm917, %v902
      %923 = vst.msk [vmem:[#allocation4 + $0x14] sm:$0xf] %vm917, %v904
      %924 = vst.msk [vmem:[#allocation4 + $0x18] sm:$0xf] %vm917, %v906
      %925 = vst.msk [vmem:[#allocation4 + $0x1c] sm:$0xf] %vm917, %v908
      %v926 = vld [vmem:[%s779 + $0x2] sm:$0xff]
      %v927 = vld [vmem:[%s779 + $0x12] sm:$0xff]
      %v928 = vld [vmem:[%s779 + $0x22] sm:$0xff]
      %v929 = vld [vmem:[%s779 + $0x32] sm:$0xff]
      %v930 = vld [vmem:[%s779 + $0x42] sm:$0xff]
      %v931 = vld [vmem:[%s779 + $0x52] sm:$0xff]
      %v932 = vld [vmem:[%s779 + $0x62] sm:$0xff]
      %v933 = vld [vmem:[%s779 + $0x72] sm:$0xff]
      %v934 = vpack.c.bf16 %v926, %v926
      %v935 = vpack.c.bf16 %v927, %v927
      %v936 = vpack.c.bf16 %v928, %v928
      %v937 = vpack.c.bf16 %v929, %v929
      %v938 = vpack.c.bf16 %v930, %v930
      %v939 = vpack.c.bf16 %v931, %v931
      %v940 = vpack.c.bf16 %v932, %v932
      %v941 = vpack.c.bf16 %v933, %v933
      %v950 = vunpack.c.l.b16 %v934
      %v951 = vunpack.c.l.b16 %v935
      %v952 = vunpack.c.l.b16 %v936
      %v953 = vunpack.c.l.b16 %v937
      %v954 = vunpack.c.l.b16 %v938
      %v955 = vunpack.c.l.b16 %v939
      %v956 = vunpack.c.l.b16 %v940
      %v957 = vunpack.c.l.b16 %v941
      %v958 = vpack.c.b16 %v950, %v950
      %v959 = vpack.c.b16 %v951, %v951
      %v960 = vpack.c.b16 %v952, %v952
      %v961 = vpack.c.b16 %v953, %v953
      %v962 = vpack.c.b16 %v954, %v954
      %v963 = vpack.c.b16 %v955, %v955
      %v964 = vpack.c.b16 %v956, %v956
      %v965 = vpack.c.b16 %v957, %v957
      %966 = vrot.lane.b32.xlu0 %v958, 32
      %v967 = vpop.permute.xlu0 %966
      %968 = vrot.lane.b32.xlu0 %v959, 32
      %v969 = vpop.permute.xlu0 %968
      %970 = vrot.lane.b32.xlu0 %v960, 32
      %v971 = vpop.permute.xlu0 %970
      %972 = vrot.lane.b32.xlu0 %v961, 32
      %v973 = vpop.permute.xlu0 %972
      %974 = vrot.lane.b32.xlu0 %v962, 32
      %v975 = vpop.permute.xlu0 %974
      %976 = vrot.lane.b32.xlu0 %v963, 32
      %v977 = vpop.permute.xlu0 %976
      %978 = vrot.lane.b32.xlu0 %v964, 32
      %v979 = vpop.permute.xlu0 %978
      %980 = vrot.lane.b32.xlu0 %v965, 32
      %v981 = vpop.permute.xlu0 %980
      %vm990 = vcmask 290048
      %991 = vst.msk [vmem:[#allocation4] sm:$0xf] %vm990, %v967
      %992 = vst.msk [vmem:[#allocation4 + $0x4] sm:$0xf] %vm990, %v969
      %993 = vst.msk [vmem:[#allocation4 + $0x8] sm:$0xf] %vm990, %v971
      %994 = vst.msk [vmem:[#allocation4 + $0xc] sm:$0xf] %vm990, %v973
      %995 = vst.msk [vmem:[#allocation4 + $0x10] sm:$0xf] %vm990, %v975
      %996 = vst.msk [vmem:[#allocation4 + $0x14] sm:$0xf] %vm990, %v977
      %997 = vst.msk [vmem:[#allocation4 + $0x18] sm:$0xf] %vm990, %v979
      %998 = vst.msk [vmem:[#allocation4 + $0x1c] sm:$0xf] %vm990, %v981
      %v999 = vld [vmem:[#allocation4] sm:$0xf]
      %v1000 = vld [vmem:[#allocation4 + $0x4] sm:$0xf]
      %v1001 = vld [vmem:[#allocation4 + $0x8] sm:$0xf]
      %v1002 = vld [vmem:[#allocation4 + $0xc] sm:$0xf]
      %v1003 = vld [vmem:[#allocation4 + $0x10] sm:$0xf]
      %v1004 = vld [vmem:[#allocation4 + $0x14] sm:$0xf]
      %v1005 = vld [vmem:[#allocation4 + $0x18] sm:$0xf]
      %v1006 = vld [vmem:[#allocation4 + $0x1c] sm:$0xf]
      %v1007 = vld [vmem:[%s1] sm:$0xf]
      %v1008 = vld [vmem:[%s1 + $0x4] sm:$0xf]
      %v1009 = vld [vmem:[%s1 + $0x8] sm:$0xf]
      %v1010 = vld [vmem:[%s1 + $0xc] sm:$0xf]
      %v1011 = vld [vmem:[%s1 + $0x10] sm:$0x3]
      %v1020 = vunpack.c.l.b16 %v999
      %v1021 = vunpack.c.l.b16 %v1000
      %v1022 = vunpack.c.l.b16 %v1001
      %v1023 = vunpack.c.l.b16 %v1002
      %v1024 = vunpack.c.l.b16 %v1003
      %v1025 = vunpack.c.l.b16 %v1004
      %v1026 = vunpack.c.l.b16 %v1005
      %v1027 = vunpack.c.l.b16 %v1006
      %v1028 = vpack.c.b16 %v1021, %v1020
      %v1029 = vpack.c.b16 %v1023, %v1022
      %v1030 = vpack.c.b16 %v1025, %v1024
      %v1031 = vpack.c.b16 %v1027, %v1026
      %v1037 = vunpack.c.l.b16 %v1007
      %v1038 = vunpack.c.l.b16 %v1008
      %v1039 = vunpack.c.l.b16 %v1009
      %v1040 = vunpack.c.l.b16 %v1010
      %v1041 = vunpack.c.l.b16 %v1011
      %v1042 = vpack.c.b16 %v1038, %v1037
      %v1043 = vpack.c.b16 %v1040, %v1039
      %v1044 = vpack.c.b16 %v1041, %v1041
      %vm1047 = vcmask 293888
      %v1049 = vsel %vm1047, %v1028, 0
      %v1052 = vsel %vm1047, %v1029, 0
      %v1055 = vsel %vm1047, %v1030, 0
      %v1058 = vsel %vm1047, %v1031, 0
      %vm1060 = vcmask 1041408
      %v1062 = vsel %vm1060, %v1044, 0
      %1064 = vmatprep.subr.bf16.mxu0 0
      %1065 = vmatpush1.bf16.msra.mxu0 %v1042
      %1066 = vmatprep.subr.bf16.mxu0 0
      %1067 = vmatpush1.bf16.msra.mxu0 %v1043
      %1068 = vmatprep.subr.bf16.mxu0 0
      %1069 = vmatpush1.bf16.msra.mxu0 %v1062
      %1070 = vmatprep.subr.bf16.mxu0 0
      %1071 = vmatpush1.bf16.msra.mxu0 0
      %1072 = vmatprep.subr.bf16.mxu0 0
      %1073 = vmatpush1.bf16.msra.mxu0 0
      %1074 = vmatprep.subr.bf16.mxu0 0
      %1075 = vmatpush1.bf16.msra.mxu0 0
      %1076 = vmatprep.subr.bf16.mxu0 0
      %1077 = vmatpush1.bf16.msra.mxu0 0
      %1078 = vmatprep.subr.bf16.mxu0 0
      %1079 = vmatpush1.bf16.msra.mxu0 0
      %1080 = vmatprep.subr.bf16.mxu0 0
      %1081 = vmatpush1.bf16.msra.mxu0 0
      %1082 = vmatprep.subr.bf16.mxu0 0
      %1083 = vmatpush1.bf16.msra.mxu0 0
      %1084 = vmatprep.subr.bf16.mxu0 0
      %1085 = vmatpush1.bf16.msra.mxu0 0
      %1086 = vmatprep.subr.bf16.mxu0 0
      %1087 = vmatpush1.bf16.msra.mxu0 0
      %1088 = vmatprep.subr.bf16.mxu0 0
      %1089 = vmatpush1.bf16.msra.mxu0 0
      %1090 = vmatprep.subr.bf16.mxu0 0
      %1091 = vmatpush1.bf16.msra.mxu0 0
      %1092 = vmatprep.subr.bf16.mxu0 0
      %1093 = vmatpush1.bf16.msra.mxu0 0
      %1094 = vmatprep.subr.bf16.mxu0 0
      %1095 = vmatpush1.bf16.msra.mxu0 0
      %1096 = vmatprep.mubr.bf16.mxu0 0
      %1097 = vmatmul.mubr.bf16.gmra.mrb[0].mxu0 %v1049
      %v1098 = vpop.f32.mrb[0].mxu0
      %v1099 = vadd.f32 0.0, %v1098
      %v1100 = vpop.f32.mrb[0].mxu0
      %v1101 = vpop.f32.mrb[0].mxu0
      %v1102 = vadd.f32 0.0, %v1101
      %v1103 = vpop.f32.mrb[0].mxu0
      %1104 = vmatprep.mubr.bf16.mxu0 0
      %1105 = vmatmul.mubr.bf16.gmra.mrb[0].mxu0 %v1052
      %v1106 = vpop.f32.mrb[0].mxu0
      %v1107 = vadd.f32 0.0, %v1106
      %v1108 = vpop.f32.mrb[0].mxu0
      %v1109 = vpop.f32.mrb[0].mxu0
      %v1110 = vadd.f32 0.0, %v1109
      %v1111 = vpop.f32.mrb[0].mxu0
      %1112 = vmatprep.mubr.bf16.mxu0 0
      %1113 = vmatmul.mubr.bf16.gmra.mrb[0].mxu0 %v1055
      %v1114 = vpop.f32.mrb[0].mxu0
      %v1115 = vadd.f32 0.0, %v1114
      %v1116 = vpop.f32.mrb[0].mxu0
      %v1117 = vpop.f32.mrb[0].mxu0
      %v1118 = vadd.f32 0.0, %v1117
      %v1119 = vpop.f32.mrb[0].mxu0
      %1120 = vmatprep.mubr.bf16.mxu0 0
      %1121 = vmatmul.mubr.bf16.gmra.mrb[0].mxu0 %v1058
      %v1122 = vpop.f32.mrb[0].mxu0
      %v1123 = vadd.f32 0.0, %v1122
      %v1124 = vpop.f32.mrb[0].mxu0
      %v1125 = vpop.f32.mrb[0].mxu0
      %v1126 = vadd.f32 0.0, %v1125
      %v1127 = vpop.f32.mrb[0].mxu0
      %1128 = vdwg.mxu0
      %v1129 = vld [vmem:[%s3] sm:$0x1]
      %v1131 = vlaneseq
      %v1132 = vshrl.u32 %v1131, 7
      %v1133 = vsub.s32 0, %v1132
      %v1134 = vrot.slane %v1129, %v1133
      %v1136 = vmul.f32 %v1099, %v1134
      %v1137 = vmul.f32 %v1102, %v1134
      %v1138 = vmul.f32 %v1107, %v1134
      %v1139 = vmul.f32 %v1110, %v1134
      %v1140 = vmul.f32 %v1115, %v1134
      %v1141 = vmul.f32 %v1118, %v1134
      %v1142 = vmul.f32 %v1123, %v1134
      %v1143 = vmul.f32 %v1126, %v1134
      %v1144 = vld [vmem:[%s4] sm:$0x1]
      %v1146 = vlaneseq
      %v1147 = vshrl.u32 %v1146, 7
      %v1148 = vsub.s32 0, %v1147
      %v1149 = vrot.slane %v1144, %v1148
      %v1151 = vadd.f32 %v1136, %v1149
      %v1152 = vadd.f32 %v1137, %v1149
      %v1153 = vadd.f32 %v1138, %v1149
      %v1154 = vadd.f32 %v1139, %v1149
      %v1155 = vadd.f32 %v1140, %v1149
      %v1156 = vadd.f32 %v1141, %v1149
      %v1157 = vadd.f32 %v1142, %v1149
      %v1158 = vadd.f32 %v1143, %v1149
      %v1159 = vmax.f32 %v1151, 0.0
      %v1160 = vmax.f32 %v1152, 0.0
      %v1161 = vmax.f32 %v1153, 0.0
      %v1162 = vmax.f32 %v1154, 0.0
      %v1163 = vmax.f32 %v1155, 0.0
      %v1164 = vmax.f32 %v1156, 0.0
      %v1165 = vmax.f32 %v1157, 0.0
      %v1166 = vmax.f32 %v1158, 0.0
      %vm1167 = vcmask 64512
      %1168 = vst.msk [vmem:[#allocation3] sm:$0xff] %vm1167, 0.0
      %vm1169 = vcmask 58368
      %1170 = vst.msk [vmem:[#allocation3 + $0x8] sm:$0x3] %vm1169, 0.0
      %s1171 = scalar_lea.vmem [#allocation3], 144
      %1172 = vst.msk [vmem:[%s1171] sm:$0xff] %vm1167, 0.0
      %1173 = vst.msk [vmem:[%s1171 + $0x8] sm:$0x3] %vm1169, 0.0
      %vm1174 = vcmask 57344
      %1175 = vst.msk [vmem:[#allocation3] sm:$0x1] %vm1174, 0.0
      %1176 = vst.msk [vmem:[#allocation3 + $0x10] sm:$0x1] %vm1174, 0.0
      %1177 = vst.msk [vmem:[#allocation3 + $0x20] sm:$0x1] %vm1174, 0.0
      %1178 = vst.msk [vmem:[#allocation3 + $0x30] sm:$0x1] %vm1174, 0.0
      %1179 = vst.msk [vmem:[#allocation3 + $0x40] sm:$0x1] %vm1174, 0.0
      %1180 = vst.msk [vmem:[#allocation3 + $0x50] sm:$0x1] %vm1174, 0.0
      %1181 = vst.msk [vmem:[#allocation3 + $0x60] sm:$0x1] %vm1174, 0.0
      %1182 = vst.msk [vmem:[#allocation3 + $0x70] sm:$0x1] %vm1174, 0.0
      %1183 = vst.msk [vmem:[#allocation3 + $0x80] sm:$0x1] %vm1174, 0.0
      %1184 = vst.msk [vmem:[#allocation3 + $0x90] sm:$0x1] %vm1174, 0.0
      %1185 = vst.msk [vmem:[#allocation3 + $0x9] sm:$0x1] %vm1174, 0.0
      %1186 = vst.msk [vmem:[#allocation3 + $0x19] sm:$0x1] %vm1174, 0.0
      %1187 = vst.msk [vmem:[#allocation3 + $0x29] sm:$0x1] %vm1174, 0.0
      %1188 = vst.msk [vmem:[#allocation3 + $0x39] sm:$0x1] %vm1174, 0.0
      %1189 = vst.msk [vmem:[#allocation3 + $0x49] sm:$0x1] %vm1174, 0.0
      %1190 = vst.msk [vmem:[#allocation3 + $0x59] sm:$0x1] %vm1174, 0.0
      %1191 = vst.msk [vmem:[#allocation3 + $0x69] sm:$0x1] %vm1174, 0.0
      %1192 = vst.msk [vmem:[#allocation3 + $0x79] sm:$0x1] %vm1174, 0.0
      %1193 = vst.msk [vmem:[#allocation3 + $0x89] sm:$0x1] %vm1174, 0.0
      %1194 = vst.msk [vmem:[#allocation3 + $0x99] sm:$0x1] %vm1174, 0.0
      %s1195 = scalar_lea.vmem [#allocation3], 16
      %1196 = vst.msk [vmem:[%s1195 + $0x1] sm:$0xff] %vm1167, %v1159
      %1197 = vst.msk [vmem:[%s1195 + $0x11] sm:$0xff] %vm1167, %v1160
      %1198 = vst.msk [vmem:[%s1195 + $0x21] sm:$0xff] %vm1167, %v1161
      %1199 = vst.msk [vmem:[%s1195 + $0x31] sm:$0xff] %vm1167, %v1162
      %1200 = vst.msk [vmem:[%s1195 + $0x41] sm:$0xff] %vm1167, %v1163
      %1201 = vst.msk [vmem:[%s1195 + $0x51] sm:$0xff] %vm1167, %v1164
      %1202 = vst.msk [vmem:[%s1195 + $0x61] sm:$0xff] %vm1167, %v1165
      %1203 = vst.msk [vmem:[%s1195 + $0x71] sm:$0xff] %vm1167, %v1166
      %v1204 = vld [vmem:[#allocation3] sm:$0xff]
      %v1205 = vld [vmem:[#allocation3 + $0x10] sm:$0xff]
      %v1206 = vld [vmem:[#allocation3 + $0x20] sm:$0xff]
      %v1207 = vld [vmem:[#allocation3 + $0x30] sm:$0xff]
      %v1208 = vld [vmem:[#allocation3 + $0x40] sm:$0xff]
      %v1209 = vld [vmem:[#allocation3 + $0x50] sm:$0xff]
      %v1210 = vld [vmem:[#allocation3 + $0x60] sm:$0xff]
      %v1211 = vld [vmem:[#allocation3 + $0x70] sm:$0xff]
      %v1212 = vpack.c.bf16 %v1204, %v1204
      %v1213 = vpack.c.bf16 %v1205, %v1205
      %v1214 = vpack.c.bf16 %v1206, %v1206
      %v1215 = vpack.c.bf16 %v1207, %v1207
      %v1216 = vpack.c.bf16 %v1208, %v1208
      %v1217 = vpack.c.bf16 %v1209, %v1209
      %v1218 = vpack.c.bf16 %v1210, %v1210
      %v1219 = vpack.c.bf16 %v1211, %v1211
      %vm1220 = vcmask 60416
      %1221 = vst.msk [vmem:[#allocation5] sm:$0xf] %vm1220, %v1212
      %1222 = vst.msk [vmem:[#allocation5 + $0x4] sm:$0xf] %vm1220, %v1213
      %1223 = vst.msk [vmem:[#allocation5 + $0x8] sm:$0xf] %vm1220, %v1214
      %1224 = vst.msk [vmem:[#allocation5 + $0xc] sm:$0xf] %vm1220, %v1215
      %1225 = vst.msk [vmem:[#allocation5 + $0x10] sm:$0xf] %vm1220, %v1216
      %1226 = vst.msk [vmem:[#allocation5 + $0x14] sm:$0xf] %vm1220, %v1217
      %1227 = vst.msk [vmem:[#allocation5 + $0x18] sm:$0xf] %vm1220, %v1218
      %1228 = vst.msk [vmem:[#allocation5 + $0x1c] sm:$0xf] %vm1220, %v1219
      %v1229 = vld [vmem:[#allocation3 + $0x1] sm:$0xff]
      %v1230 = vld [vmem:[#allocation3 + $0x11] sm:$0xff]
      %v1231 = vld [vmem:[#allocation3 + $0x21] sm:$0xff]
      %v1232 = vld [vmem:[#allocation3 + $0x31] sm:$0xff]
      %v1233 = vld [vmem:[#allocation3 + $0x41] sm:$0xff]
      %v1234 = vld [vmem:[#allocation3 + $0x51] sm:$0xff]
      %v1235 = vld [vmem:[#allocation3 + $0x61] sm:$0xff]
      %v1236 = vld [vmem:[#allocation3 + $0x71] sm:$0xff]
      %v1237 = vpack.c.bf16 %v1229, %v1229
      %v1238 = vpack.c.bf16 %v1230, %v1230
      %v1239 = vpack.c.bf16 %v1231, %v1231
      %v1240 = vpack.c.bf16 %v1232, %v1232
      %v1241 = vpack.c.bf16 %v1233, %v1233
      %v1242 = vpack.c.bf16 %v1234, %v1234
      %v1243 = vpack.c.bf16 %v1235, %v1235
      %v1244 = vpack.c.bf16 %v1236, %v1236
      %v1253 = vunpack.c.l.b16 %v1237
      %v1254 = vunpack.c.l.b16 %v1238
      %v1255 = vunpack.c.l.b16 %v1239
      %v1256 = vunpack.c.l.b16 %v1240
      %v1257 = vunpack.c.l.b16 %v1241
      %v1258 = vunpack.c.l.b16 %v1242
      %v1259 = vunpack.c.l.b16 %v1243
      %v1260 = vunpack.c.l.b16 %v1244
      %v1261 = vpack.c.b16 %v1253, %v1253
      %v1262 = vpack.c.b16 %v1254, %v1254
      %v1263 = vpack.c.b16 %v1255, %v1255
      %v1264 = vpack.c.b16 %v1256, %v1256
      %v1265 = vpack.c.b16 %v1257, %v1257
      %v1266 = vpack.c.b16 %v1258, %v1258
      %v1267 = vpack.c.b16 %v1259, %v1259
      %v1268 = vpack.c.b16 %v1260, %v1260
      %1269 = vrot.lane.b32.xlu0 %v1261, 8
      %v1270 = vpop.permute.xlu0 %1269
      %1271 = vrot.lane.b32.xlu0 %v1262, 8
      %v1272 = vpop.permute.xlu0 %1271
      %1273 = vrot.lane.b32.xlu0 %v1263, 8
      %v1274 = vpop.permute.xlu0 %1273
      %1275 = vrot.lane.b32.xlu0 %v1264, 8
      %v1276 = vpop.permute.xlu0 %1275
      %1277 = vrot.lane.b32.xlu0 %v1265, 8
      %v1278 = vpop.permute.xlu0 %1277
      %1279 = vrot.lane.b32.xlu0 %v1266, 8
      %v1280 = vpop.permute.xlu0 %1279
      %1281 = vrot.lane.b32.xlu0 %v1267, 8
      %v1282 = vpop.permute.xlu0 %1281
      %1283 = vrot.lane.b32.xlu0 %v1268, 8
      %v1284 = vpop.permute.xlu0 %1283
      %vm1293 = vcmask 126016
      %1294 = vst.msk [vmem:[#allocation5] sm:$0xf] %vm1293, %v1270
      %1295 = vst.msk [vmem:[#allocation5 + $0x4] sm:$0xf] %vm1293, %v1272
      %1296 = vst.msk [vmem:[#allocation5 + $0x8] sm:$0xf] %vm1293, %v1274
      %1297 = vst.msk [vmem:[#allocation5 + $0xc] sm:$0xf] %vm1293, %v1276
      %1298 = vst.msk [vmem:[#allocation5 + $0x10] sm:$0xf] %vm1293, %v1278
      %1299 = vst.msk [vmem:[#allocation5 + $0x14] sm:$0xf] %vm1293, %v1280
      %1300 = vst.msk [vmem:[#allocation5 + $0x18] sm:$0xf] %vm1293, %v1282
      %1301 = vst.msk [vmem:[#allocation5 + $0x1c] sm:$0xf] %vm1293, %v1284
      %v1302 = vld [vmem:[#allocation3 + $0x2] sm:$0xff]
      %v1303 = vld [vmem:[#allocation3 + $0x12] sm:$0xff]
      %v1304 = vld [vmem:[#allocation3 + $0x22] sm:$0xff]
      %v1305 = vld [vmem:[#allocation3 + $0x32] sm:$0xff]
      %v1306 = vld [vmem:[#allocation3 + $0x42] sm:$0xff]
      %v1307 = vld [vmem:[#allocation3 + $0x52] sm:$0xff]
      %v1308 = vld [vmem:[#allocation3 + $0x62] sm:$0xff]
      %v1309 = vld [vmem:[#allocation3 + $0x72] sm:$0xff]
      %v1310 = vpack.c.bf16 %v1302, %v1302
      %v1311 = vpack.c.bf16 %v1303, %v1303
      %v1312 = vpack.c.bf16 %v1304, %v1304
      %v1313 = vpack.c.bf16 %v1305, %v1305
      %v1314 = vpack.c.bf16 %v1306, %v1306
      %v1315 = vpack.c.bf16 %v1307, %v1307
      %v1316 = vpack.c.bf16 %v1308, %v1308
      %v1317 = vpack.c.bf16 %v1309, %v1309
      %v1326 = vunpack.c.l.b16 %v1310
      %v1327 = vunpack.c.l.b16 %v1311
      %v1328 = vunpack.c.l.b16 %v1312
      %v1329 = vunpack.c.l.b16 %v1313
      %v1330 = vunpack.c.l.b16 %v1314
      %v1331 = vunpack.c.l.b16 %v1315
      %v1332 = vunpack.c.l.b16 %v1316
      %v1333 = vunpack.c.l.b16 %v1317
      %v1334 = vpack.c.b16 %v1326, %v1326
      %v1335 = vpack.c.b16 %v1327, %v1327
      %v1336 = vpack.c.b16 %v1328, %v1328
      %v1337 = vpack.c.b16 %v1329, %v1329
      %v1338 = vpack.c.b16 %v1330, %v1330
      %v1339 = vpack.c.b16 %v1331, %v1331
      %v1340 = vpack.c.b16 %v1332, %v1332
      %v1341 = vpack.c.b16 %v1333, %v1333
      %1342 = vrot.lane.b32.xlu0 %v1334, 16
      %v1343 = vpop.permute.xlu0 %1342
      %1344 = vrot.lane.b32.xlu0 %v1335, 16
      %v1345 = vpop.permute.xlu0 %1344
      %1346 = vrot.lane.b32.xlu0 %v1336, 16
      %v1347 = vpop.permute.xlu0 %1346
      %1348 = vrot.lane.b32.xlu0 %v1337, 16
      %v1349 = vpop.permute.xlu0 %1348
      %1350 = vrot.lane.b32.xlu0 %v1338, 16
      %v1351 = vpop.permute.xlu0 %1350
      %1352 = vrot.lane.b32.xlu0 %v1339, 16
      %v1353 = vpop.permute.xlu0 %1352
      %1354 = vrot.lane.b32.xlu0 %v1340, 16
      %v1355 = vpop.permute.xlu0 %1354
      %1356 = vrot.lane.b32.xlu0 %v1341, 16
      %v1357 = vpop.permute.xlu0 %1356
      %vm1366 = vcmask 191616
      %1367 = vst.msk [vmem:[#allocation5] sm:$0xf] %vm1366, %v1343
      %1368 = vst.msk [vmem:[#allocation5 + $0x4] sm:$0xf] %vm1366, %v1345
      %1369 = vst.msk [vmem:[#allocation5 + $0x8] sm:$0xf] %vm1366, %v1347
      %1370 = vst.msk [vmem:[#allocation5 + $0xc] sm:$0xf] %vm1366, %v1349
      %1371 = vst.msk [vmem:[#allocation5 + $0x10] sm:$0xf] %vm1366, %v1351
      %1372 = vst.msk [vmem:[#allocation5 + $0x14] sm:$0xf] %vm1366, %v1353
      %1373 = vst.msk [vmem:[#allocation5 + $0x18] sm:$0xf] %vm1366, %v1355
      %1374 = vst.msk [vmem:[#allocation5 + $0x1c] sm:$0xf] %vm1366, %v1357
      %v1375 = vld [vmem:[%s1195] sm:$0xff]
      %v1376 = vld [vmem:[%s1195 + $0x10] sm:$0xff]
      %v1377 = vld [vmem:[%s1195 + $0x20] sm:$0xff]
      %v1378 = vld [vmem:[%s1195 + $0x30] sm:$0xff]
      %v1379 = vld [vmem:[%s1195 + $0x40] sm:$0xff]
      %v1380 = vld [vmem:[%s1195 + $0x50] sm:$0xff]
      %v1381 = vld [vmem:[%s1195 + $0x60] sm:$0xff]
      %v1382 = vld [vmem:[%s1195 + $0x70] sm:$0xff]
      %v1383 = vpack.c.bf16 %v1375, %v1375
      %v1384 = vpack.c.bf16 %v1376, %v1376
      %v1385 = vpack.c.bf16 %v1377, %v1377
      %v1386 = vpack.c.bf16 %v1378, %v1378
      %v1387 = vpack.c.bf16 %v1379, %v1379
      %v1388 = vpack.c.bf16 %v1380, %v1380
      %v1389 = vpack.c.bf16 %v1381, %v1381
      %v1390 = vpack.c.bf16 %v1382, %v1382
      %v1399 = vunpack.c.l.b16 %v1383
      %v1400 = vunpack.c.l.b16 %v1384
      %v1401 = vunpack.c.l.b16 %v1385
      %v1402 = vunpack.c.l.b16 %v1386
      %v1403 = vunpack.c.l.b16 %v1387
      %v1404 = vunpack.c.l.b16 %v1388
      %v1405 = vunpack.c.l.b16 %v1389
      %v1406 = vunpack.c.l.b16 %v1390
      %v1407 = vpack.c.b16 %v1399, %v1399
      %v1408 = vpack.c.b16 %v1400, %v1400
      %v1409 = vpack.c.b16 %v1401, %v1401
      %v1410 = vpack.c.b16 %v1402, %v1402
      %v1411 = vpack.c.b16 %v1403, %v1403
      %v1412 = vpack.c.b16 %v1404, %v1404
      %v1413 = vpack.c.b16 %v1405, %v1405
      %v1414 = vpack.c.b16 %v1406, %v1406
      %1415 = vrot.lane.b32.xlu0 %v1407, 24
      %v1416 = vpop.permute.xlu0 %1415
      %1417 = vrot.lane.b32.xlu0 %v1408, 24
      %v1418 = vpop.permute.xlu0 %1417
      %1419 = vrot.lane.b32.xlu0 %v1409, 24
      %v1420 = vpop.permute.xlu0 %1419
      %1421 = vrot.lane.b32.xlu0 %v1410, 24
      %v1422 = vpop.permute.xlu0 %1421
      %1423 = vrot.lane.b32.xlu0 %v1411, 24
      %v1424 = vpop.permute.xlu0 %1423
      %1425 = vrot.lane.b32.xlu0 %v1412, 24
      %v1426 = vpop.permute.xlu0 %1425
      %1427 = vrot.lane.b32.xlu0 %v1413, 24
      %v1428 = vpop.permute.xlu0 %1427
      %1429 = vrot.lane.b32.xlu0 %v1414, 24
      %v1430 = vpop.permute.xlu0 %1429
      %vm1439 = vcmask 257216
      %1440 = vst.msk [vmem:[#allocation5] sm:$0xf] %vm1439, %v1416
      %1441 = vst.msk [vmem:[#allocation5 + $0x4] sm:$0xf] %vm1439, %v1418
      %1442 = vst.msk [vmem:[#allocation5 + $0x8] sm:$0xf] %vm1439, %v1420
      %1443 = vst.msk [vmem:[#allocation5 + $0xc] sm:$0xf] %vm1439, %v1422
      %1444 = vst.msk [vmem:[#allocation5 + $0x10] sm:$0xf] %vm1439, %v1424
      %1445 = vst.msk [vmem:[#allocation5 + $0x14] sm:$0xf] %vm1439, %v1426
      %1446 = vst.msk [vmem:[#allocation5 + $0x18] sm:$0xf] %vm1439, %v1428
      %1447 = vst.msk [vmem:[#allocation5 + $0x1c] sm:$0xf] %vm1439, %v1430
      %v1448 = vld [vmem:[%s1195 + $0x1] sm:$0xff]
      %v1449 = vld [vmem:[%s1195 + $0x11] sm:$0xff]
      %v1450 = vld [vmem:[%s1195 + $0x21] sm:$0xff]
      %v1451 = vld [vmem:[%s1195 + $0x31] sm:$0xff]
      %v1452 = vld [vmem:[%s1195 + $0x41] sm:$0xff]
      %v1453 = vld [vmem:[%s1195 + $0x51] sm:$0xff]
      %v1454 = vld [vmem:[%s1195 + $0x61] sm:$0xff]
      %v1455 = vld [vmem:[%s1195 + $0x71] sm:$0xff]
      %v1456 = vpack.c.bf16 %v1448, %v1448
      %v1457 = vpack.c.bf16 %v1449, %v1449
      %v1458 = vpack.c.bf16 %v1450, %v1450
      %v1459 = vpack.c.bf16 %v1451, %v1451
      %v1460 = vpack.c.bf16 %v1452, %v1452
      %v1461 = vpack.c.bf16 %v1453, %v1453
      %v1462 = vpack.c.bf16 %v1454, %v1454
      %v1463 = vpack.c.bf16 %v1455, %v1455
      %v1472 = vunpack.c.l.b16 %v1456
      %v1473 = vunpack.c.l.b16 %v1457
      %v1474 = vunpack.c.l.b16 %v1458
      %v1475 = vunpack.c.l.b16 %v1459
      %v1476 = vunpack.c.l.b16 %v1460
      %v1477 = vunpack.c.l.b16 %v1461
      %v1478 = vunpack.c.l.b16 %v1462
      %v1479 = vunpack.c.l.b16 %v1463
      %v1480 = vpack.c.b16 %v1472, %v1472
      %v1481 = vpack.c.b16 %v1473, %v1473
      %v1482 = vpack.c.b16 %v1474, %v1474
      %v1483 = vpack.c.b16 %v1475, %v1475
      %v1484 = vpack.c.b16 %v1476, %v1476
      %v1485 = vpack.c.b16 %v1477, %v1477
      %v1486 = vpack.c.b16 %v1478, %v1478
      %v1487 = vpack.c.b16 %v1479, %v1479
      %1488 = vrot.lane.b32.xlu0 %v1480, 32
      %v1489 = vpop.permute.xlu0 %1488
      %1490 = vrot.lane.b32.xlu0 %v1481, 32
      %v1491 = vpop.permute.xlu0 %1490
      %1492 = vrot.lane.b32.xlu0 %v1482, 32
      %v1493 = vpop.permute.xlu0 %1492
      %1494 = vrot.lane.b32.xlu0 %v1483, 32
      %v1495 = vpop.permute.xlu0 %1494
      %1496 = vrot.lane.b32.xlu0 %v1484, 32
      %v1497 = vpop.permute.xlu0 %1496
      %1498 = vrot.lane.b32.xlu0 %v1485, 32
      %v1499 = vpop.permute.xlu0 %1498
      %1500 = vrot.lane.b32.xlu0 %v1486, 32
      %v1501 = vpop.permute.xlu0 %1500
      %1502 = vrot.lane.b32.xlu0 %v1487, 32
      %v1503 = vpop.permute.xlu0 %1502
      %vm1512 = vcmask 322816
      %1513 = vst.msk [vmem:[#allocation5] sm:$0xf] %vm1512, %v1489
      %1514 = vst.msk [vmem:[#allocation5 + $0x4] sm:$0xf] %vm1512, %v1491
      %1515 = vst.msk [vmem:[#allocation5 + $0x8] sm:$0xf] %vm1512, %v1493
      %1516 = vst.msk [vmem:[#allocation5 + $0xc] sm:$0xf] %vm1512, %v1495
      %1517 = vst.msk [vmem:[#allocation5 + $0x10] sm:$0xf] %vm1512, %v1497
      %1518 = vst.msk [vmem:[#allocation5 + $0x14] sm:$0xf] %vm1512, %v1499
      %1519 = vst.msk [vmem:[#allocation5 + $0x18] sm:$0xf] %vm1512, %v1501
      %1520 = vst.msk [vmem:[#allocation5 + $0x1c] sm:$0xf] %vm1512, %v1503
      %v1521 = vld [vmem:[%s1195 + $0x2] sm:$0xff]
      %v1522 = vld [vmem:[%s1195 + $0x12] sm:$0xff]
      %v1523 = vld [vmem:[%s1195 + $0x22] sm:$0xff]
      %v1524 = vld [vmem:[%s1195 + $0x32] sm:$0xff]
      %v1525 = vld [vmem:[%s1195 + $0x42] sm:$0xff]
      %v1526 = vld [vmem:[%s1195 + $0x52] sm:$0xff]
      %v1527 = vld [vmem:[%s1195 + $0x62] sm:$0xff]
      %v1528 = vld [vmem:[%s1195 + $0x72] sm:$0xff]
      %v1529 = vpack.c.bf16 %v1521, %v1521
      %v1530 = vpack.c.bf16 %v1522, %v1522
      %v1531 = vpack.c.bf16 %v1523, %v1523
      %v1532 = vpack.c.bf16 %v1524, %v1524
      %v1533 = vpack.c.bf16 %v1525, %v1525
      %v1534 = vpack.c.bf16 %v1526, %v1526
      %v1535 = vpack.c.bf16 %v1527, %v1527
      %v1536 = vpack.c.bf16 %v1528, %v1528
      %v1545 = vunpack.c.l.b16 %v1529
      %v1546 = vunpack.c.l.b16 %v1530
      %v1547 = vunpack.c.l.b16 %v1531
      %v1548 = vunpack.c.l.b16 %v1532
      %v1549 = vunpack.c.l.b16 %v1533
      %v1550 = vunpack.c.l.b16 %v1534
      %v1551 = vunpack.c.l.b16 %v1535
      %v1552 = vunpack.c.l.b16 %v1536
      %v1553 = vpack.c.b16 %v1545, %v1545
      %v1554 = vpack.c.b16 %v1546, %v1546
      %v1555 = vpack.c.b16 %v1547, %v1547
      %v1556 = vpack.c.b16 %v1548, %v1548
      %v1557 = vpack.c.b16 %v1549, %v1549
      %v1558 = vpack.c.b16 %v1550, %v1550
      %v1559 = vpack.c.b16 %v1551, %v1551
      %v1560 = vpack.c.b16 %v1552, %v1552
      %1561 = vrot.lane.b32.xlu0 %v1553, 40
      %v1562 = vpop.permute.xlu0 %1561
      %1563 = vrot.lane.b32.xlu0 %v1554, 40
      %v1564 = vpop.permute.xlu0 %1563
      %1565 = vrot.lane.b32.xlu0 %v1555, 40
      %v1566 = vpop.permute.xlu0 %1565
      %1567 = vrot.lane.b32.xlu0 %v1556, 40
      %v1568 = vpop.permute.xlu0 %1567
      %1569 = vrot.lane.b32.xlu0 %v1557, 40
      %v1570 = vpop.permute.xlu0 %1569
      %1571 = vrot.lane.b32.xlu0 %v1558, 40
      %v1572 = vpop.permute.xlu0 %1571
      %1573 = vrot.lane.b32.xlu0 %v1559, 40
      %v1574 = vpop.permute.xlu0 %1573
      %1575 = vrot.lane.b32.xlu0 %v1560, 40
      %v1576 = vpop.permute.xlu0 %1575
      %vm1585 = vcmask 388416
      %1586 = vst.msk [vmem:[#allocation5] sm:$0xf] %vm1585, %v1562
      %1587 = vst.msk [vmem:[#allocation5 + $0x4] sm:$0xf] %vm1585, %v1564
      %1588 = vst.msk [vmem:[#allocation5 + $0x8] sm:$0xf] %vm1585, %v1566
      %1589 = vst.msk [vmem:[#allocation5 + $0xc] sm:$0xf] %vm1585, %v1568
      %1590 = vst.msk [vmem:[#allocation5 + $0x10] sm:$0xf] %vm1585, %v1570
      %1591 = vst.msk [vmem:[#allocation5 + $0x14] sm:$0xf] %vm1585, %v1572
      %1592 = vst.msk [vmem:[#allocation5 + $0x18] sm:$0xf] %vm1585, %v1574
      %1593 = vst.msk [vmem:[#allocation5 + $0x1c] sm:$0xf] %vm1585, %v1576
      %s1594 = scalar_lea.vmem [#allocation3], 32
      %v1595 = vld [vmem:[%s1594] sm:$0xff]
      %v1596 = vld [vmem:[%s1594 + $0x10] sm:$0xff]
      %v1597 = vld [vmem:[%s1594 + $0x20] sm:$0xff]
      %v1598 = vld [vmem:[%s1594 + $0x30] sm:$0xff]
      %v1599 = vld [vmem:[%s1594 + $0x40] sm:$0xff]
      %v1600 = vld [vmem:[%s1594 + $0x50] sm:$0xff]
      %v1601 = vld [vmem:[%s1594 + $0x60] sm:$0xff]
      %v1602 = vld [vmem:[%s1594 + $0x70] sm:$0xff]
      %v1603 = vpack.c.bf16 %v1595, %v1595
      %v1604 = vpack.c.bf16 %v1596, %v1596
      %v1605 = vpack.c.bf16 %v1597, %v1597
      %v1606 = vpack.c.bf16 %v1598, %v1598
      %v1607 = vpack.c.bf16 %v1599, %v1599
      %v1608 = vpack.c.bf16 %v1600, %v1600
      %v1609 = vpack.c.bf16 %v1601, %v1601
      %v1610 = vpack.c.bf16 %v1602, %v1602
      %v1619 = vunpack.c.l.b16 %v1603
      %v1620 = vunpack.c.l.b16 %v1604
      %v1621 = vunpack.c.l.b16 %v1605
      %v1622 = vunpack.c.l.b16 %v1606
      %v1623 = vunpack.c.l.b16 %v1607
      %v1624 = vunpack.c.l.b16 %v1608
      %v1625 = vunpack.c.l.b16 %v1609
      %v1626 = vunpack.c.l.b16 %v1610
      %v1627 = vpack.c.b16 %v1619, %v1619
      %v1628 = vpack.c.b16 %v1620, %v1620
      %v1629 = vpack.c.b16 %v1621, %v1621
      %v1630 = vpack.c.b16 %v1622, %v1622
      %v1631 = vpack.c.b16 %v1623, %v1623
      %v1632 = vpack.c.b16 %v1624, %v1624
      %v1633 = vpack.c.b16 %v1625, %v1625
      %v1634 = vpack.c.b16 %v1626, %v1626
      %1635 = vrot.lane.b32.xlu0 %v1627, 48
      %v1636 = vpop.permute.xlu0 %1635
      %1637 = vrot.lane.b32.xlu0 %v1628, 48
      %v1638 = vpop.permute.xlu0 %1637
      %1639 = vrot.lane.b32.xlu0 %v1629, 48
      %v1640 = vpop.permute.xlu0 %1639
      %1641 = vrot.lane.b32.xlu0 %v1630, 48
      %v1642 = vpop.permute.xlu0 %1641
      %1643 = vrot.lane.b32.xlu0 %v1631, 48
      %v1644 = vpop.permute.xlu0 %1643
      %1645 = vrot.lane.b32.xlu0 %v1632, 48
      %v1646 = vpop.permute.xlu0 %1645
      %1647 = vrot.lane.b32.xlu0 %v1633, 48
      %v1648 = vpop.permute.xlu0 %1647
      %1649 = vrot.lane.b32.xlu0 %v1634, 48
      %v1650 = vpop.permute.xlu0 %1649
      %vm1659 = vcmask 454016
      %1660 = vst.msk [vmem:[#allocation5] sm:$0xf] %vm1659, %v1636
      %1661 = vst.msk [vmem:[#allocation5 + $0x4] sm:$0xf] %vm1659, %v1638
      %1662 = vst.msk [vmem:[#allocation5 + $0x8] sm:$0xf] %vm1659, %v1640
      %1663 = vst.msk [vmem:[#allocation5 + $0xc] sm:$0xf] %vm1659, %v1642
      %1664 = vst.msk [vmem:[#allocation5 + $0x10] sm:$0xf] %vm1659, %v1644
      %1665 = vst.msk [vmem:[#allocation5 + $0x14] sm:$0xf] %vm1659, %v1646
      %1666 = vst.msk [vmem:[#allocation5 + $0x18] sm:$0xf] %vm1659, %v1648
      %1667 = vst.msk [vmem:[#allocation5 + $0x1c] sm:$0xf] %vm1659, %v1650
      %v1668 = vld [vmem:[%s1594 + $0x1] sm:$0xff]
      %v1669 = vld [vmem:[%s1594 + $0x11] sm:$0xff]
      %v1670 = vld [vmem:[%s1594 + $0x21] sm:$0xff]
      %v1671 = vld [vmem:[%s1594 + $0x31] sm:$0xff]
      %v1672 = vld [vmem:[%s1594 + $0x41] sm:$0xff]
      %v1673 = vld [vmem:[%s1594 + $0x51] sm:$0xff]
      %v1674 = vld [vmem:[%s1594 + $0x61] sm:$0xff]
      %v1675 = vld [vmem:[%s1594 + $0x71] sm:$0xff]
      %v1676 = vpack.c.bf16 %v1668, %v1668
      %v1677 = vpack.c.bf16 %v1669, %v1669
      %v1678 = vpack.c.bf16 %v1670, %v1670
      %v1679 = vpack.c.bf16 %v1671, %v1671
      %v1680 = vpack.c.bf16 %v1672, %v1672
      %v1681 = vpack.c.bf16 %v1673, %v1673
      %v1682 = vpack.c.bf16 %v1674, %v1674
      %v1683 = vpack.c.bf16 %v1675, %v1675
      %v1692 = vunpack.c.l.b16 %v1676
      %v1693 = vunpack.c.l.b16 %v1677
      %v1694 = vunpack.c.l.b16 %v1678
      %v1695 = vunpack.c.l.b16 %v1679
      %v1696 = vunpack.c.l.b16 %v1680
      %v1697 = vunpack.c.l.b16 %v1681
      %v1698 = vunpack.c.l.b16 %v1682
      %v1699 = vunpack.c.l.b16 %v1683
      %v1700 = vpack.c.b16 %v1692, %v1692
      %v1701 = vpack.c.b16 %v1693, %v1693
      %v1702 = vpack.c.b16 %v1694, %v1694
      %v1703 = vpack.c.b16 %v1695, %v1695
      %v1704 = vpack.c.b16 %v1696, %v1696
      %v1705 = vpack.c.b16 %v1697, %v1697
      %v1706 = vpack.c.b16 %v1698, %v1698
      %v1707 = vpack.c.b16 %v1699, %v1699
      %1708 = vrot.lane.b32.xlu0 %v1700, 56
      %v1709 = vpop.permute.xlu0 %1708
      %1710 = vrot.lane.b32.xlu0 %v1701, 56
      %v1711 = vpop.permute.xlu0 %1710
      %1712 = vrot.lane.b32.xlu0 %v1702, 56
      %v1713 = vpop.permute.xlu0 %1712
      %1714 = vrot.lane.b32.xlu0 %v1703, 56
      %v1715 = vpop.permute.xlu0 %1714
      %1716 = vrot.lane.b32.xlu0 %v1704, 56
      %v1717 = vpop.permute.xlu0 %1716
      %1718 = vrot.lane.b32.xlu0 %v1705, 56
      %v1719 = vpop.permute.xlu0 %1718
      %1720 = vrot.lane.b32.xlu0 %v1706, 56
      %v1721 = vpop.permute.xlu0 %1720
      %1722 = vrot.lane.b32.xlu0 %v1707, 56
      %v1723 = vpop.permute.xlu0 %1722
      %vm1732 = vcmask 519616
      %1733 = vst.msk [vmem:[#allocation5] sm:$0xf] %vm1732, %v1709
      %1734 = vst.msk [vmem:[#allocation5 + $0x4] sm:$0xf] %vm1732, %v1711
      %1735 = vst.msk [vmem:[#allocation5 + $0x8] sm:$0xf] %vm1732, %v1713
      %1736 = vst.msk [vmem:[#allocation5 + $0xc] sm:$0xf] %vm1732, %v1715
      %1737 = vst.msk [vmem:[#allocation5 + $0x10] sm:$0xf] %vm1732, %v1717
      %1738 = vst.msk [vmem:[#allocation5 + $0x14] sm:$0xf] %vm1732, %v1719
      %1739 = vst.msk [vmem:[#allocation5 + $0x18] sm:$0xf] %vm1732, %v1721
      %1740 = vst.msk [vmem:[#allocation5 + $0x1c] sm:$0xf] %vm1732, %v1723
      %v1741 = vld [vmem:[%s1594 + $0x2] sm:$0xff]
      %v1742 = vld [vmem:[%s1594 + $0x12] sm:$0xff]
      %v1743 = vld [vmem:[%s1594 + $0x22] sm:$0xff]
      %v1744 = vld [vmem:[%s1594 + $0x32] sm:$0xff]
      %v1745 = vld [vmem:[%s1594 + $0x42] sm:$0xff]
      %v1746 = vld [vmem:[%s1594 + $0x52] sm:$0xff]
      %v1747 = vld [vmem:[%s1594 + $0x62] sm:$0xff]
      %v1748 = vld [vmem:[%s1594 + $0x72] sm:$0xff]
      %v1749 = vpack.c.bf16 %v1741, %v1741
      %v1750 = vpack.c.bf16 %v1742, %v1742
      %v1751 = vpack.c.bf16 %v1743, %v1743
      %v1752 = vpack.c.bf16 %v1744, %v1744
      %v1753 = vpack.c.bf16 %v1745, %v1745
      %v1754 = vpack.c.bf16 %v1746, %v1746
      %v1755 = vpack.c.bf16 %v1747, %v1747
      %v1756 = vpack.c.bf16 %v1748, %v1748
      %v1765 = vunpack.c.l.b16 %v1749
      %v1766 = vunpack.c.l.b16 %v1750
      %v1767 = vunpack.c.l.b16 %v1751
      %v1768 = vunpack.c.l.b16 %v1752
      %v1769 = vunpack.c.l.b16 %v1753
      %v1770 = vunpack.c.l.b16 %v1754
      %v1771 = vunpack.c.l.b16 %v1755
      %v1772 = vunpack.c.l.b16 %v1756
      %v1773 = vpack.c.b16 %v1765, %v1765
      %v1774 = vpack.c.b16 %v1766, %v1766
      %v1775 = vpack.c.b16 %v1767, %v1767
      %v1776 = vpack.c.b16 %v1768, %v1768
      %v1777 = vpack.c.b16 %v1769, %v1769
      %v1778 = vpack.c.b16 %v1770, %v1770
      %v1779 = vpack.c.b16 %v1771, %v1771
      %v1780 = vpack.c.b16 %v1772, %v1772
      %1781 = vrot.lane.b32.xlu0 %v1773, 64
      %v1782 = vpop.permute.xlu0 %1781
      %1783 = vrot.lane.b32.xlu0 %v1774, 64
      %v1784 = vpop.permute.xlu0 %1783
      %1785 = vrot.lane.b32.xlu0 %v1775, 64
      %v1786 = vpop.permute.xlu0 %1785
      %1787 = vrot.lane.b32.xlu0 %v1776, 64
      %v1788 = vpop.permute.xlu0 %1787
      %1789 = vrot.lane.b32.xlu0 %v1777, 64
      %v1790 = vpop.permute.xlu0 %1789
      %1791 = vrot.lane.b32.xlu0 %v1778, 64
      %v1792 = vpop.permute.xlu0 %1791
      %1793 = vrot.lane.b32.xlu0 %v1779, 64
      %v1794 = vpop.permute.xlu0 %1793
      %1795 = vrot.lane.b32.xlu0 %v1780, 64
      %v1796 = vpop.permute.xlu0 %1795
      %vm1805 = vcmask 585216
      %1806 = vst.msk [vmem:[#allocation5] sm:$0xf] %vm1805, %v1782
      %1807 = vst.msk [vmem:[#allocation5 + $0x4] sm:$0xf] %vm1805, %v1784
      %1808 = vst.msk [vmem:[#allocation5 + $0x8] sm:$0xf] %vm1805, %v1786
      %1809 = vst.msk [vmem:[#allocation5 + $0xc] sm:$0xf] %vm1805, %v1788
      %1810 = vst.msk [vmem:[#allocation5 + $0x10] sm:$0xf] %vm1805, %v1790
      %1811 = vst.msk [vmem:[#allocation5 + $0x14] sm:$0xf] %vm1805, %v1792
      %1812 = vst.msk [vmem:[#allocation5 + $0x18] sm:$0xf] %vm1805, %v1794
      %1813 = vst.msk [vmem:[#allocation5 + $0x1c] sm:$0xf] %vm1805, %v1796
      %v1814 = vld [vmem:[#allocation5] sm:$0xf]
      %v1815 = vld [vmem:[#allocation5 + $0x4] sm:$0xf]
      %v1816 = vld [vmem:[#allocation5 + $0x8] sm:$0xf]
      %v1817 = vld [vmem:[#allocation5 + $0xc] sm:$0xf]
      %v1818 = vld [vmem:[#allocation5 + $0x10] sm:$0xf]
      %v1819 = vld [vmem:[#allocation5 + $0x14] sm:$0xf]
      %v1820 = vld [vmem:[#allocation5 + $0x18] sm:$0xf]
      %v1821 = vld [vmem:[#allocation5 + $0x1c] sm:$0xf]
      %v1822 = vld [vmem:[%s2] sm:$0xf]
      %v1823 = vld [vmem:[%s2 + $0x4] sm:$0xf]
      %v1824 = vld [vmem:[%s2 + $0x8] sm:$0xf]
      %v1825 = vld [vmem:[%s2 + $0xc] sm:$0xf]
      %v1826 = vld [vmem:[%s2 + $0x10] sm:$0xf]
      %v1827 = vld [vmem:[%s2 + $0x14] sm:$0xf]
      %v1828 = vld [vmem:[%s2 + $0x18] sm:$0xf]
      %v1829 = vld [vmem:[%s2 + $0x1c] sm:$0xf]
      %v1830 = vld [vmem:[%s2 + $0x20] sm:$0xf]
      %v1839 = vunpack.c.l.b16 %v1814
      %v1840 = vunpack.c.l.b16 %v1815
      %v1841 = vunpack.c.l.b16 %v1816
      %v1842 = vunpack.c.l.b16 %v1817
      %v1843 = vunpack.c.l.b16 %v1818
      %v1844 = vunpack.c.l.b16 %v1819
      %v1845 = vunpack.c.l.b16 %v1820
      %v1846 = vunpack.c.l.b16 %v1821
      %v1847 = vpack.c.b16 %v1840, %v1839
      %v1848 = vpack.c.b16 %v1842, %v1841
      %v1849 = vpack.c.b16 %v1844, %v1843
      %v1850 = vpack.c.b16 %v1846, %v1845
      %v1860 = vunpack.c.l.b16 %v1822
      %v1861 = vunpack.c.l.b16 %v1823
      %v1862 = vunpack.c.l.b16 %v1824
      %v1863 = vunpack.c.l.b16 %v1825
      %v1864 = vunpack.c.l.b16 %v1826
      %v1865 = vunpack.c.l.b16 %v1827
      %v1866 = vunpack.c.l.b16 %v1828
      %v1867 = vunpack.c.l.b16 %v1829
      %v1868 = vunpack.c.l.b16 %v1830
      %v1869 = vpack.c.b16 %v1861, %v1860
      %v1870 = vpack.c.b16 %v1863, %v1862
      %v1871 = vpack.c.b16 %v1865, %v1864
      %v1872 = vpack.c.b16 %v1867, %v1866
      %v1873 = vpack.c.b16 %v1868, %v1868
      %vm1878 = vcmask 588800
      %v1880 = vsel %vm1878, %v1847, 0
      %v1883 = vsel %vm1878, %v1848, 0
      %v1886 = vsel %vm1878, %v1849, 0
      %v1889 = vsel %vm1878, %v1850, 0
      %vm1891 = vcmask 1043456
      %v1893 = vsel %vm1891, %v1873, 0
      %1895 = vmatprep.subr.bf16.mxu0 0
      %1896 = vmatpush1.bf16.msra.mxu0 %v1869
      %1897 = vmatprep.subr.bf16.mxu0 0
      %1898 = vmatpush1.bf16.msra.mxu0 %v1870
      %1899 = vmatprep.subr.bf16.mxu0 0
      %1900 = vmatpush1.bf16.msra.mxu0 %v1871
      %1901 = vmatprep.subr.bf16.mxu0 0
      %1902 = vmatpush1.bf16.msra.mxu0 %v1872
      %1903 = vmatprep.subr.bf16.mxu0 0
      %1904 = vmatpush1.bf16.msra.mxu0 %v1893
      %1905 = vmatprep.subr.bf16.mxu0 0
      %1906 = vmatpush1.bf16.msra.mxu0 0
      %1907 = vmatprep.subr.bf16.mxu0 0
      %1908 = vmatpush1.bf16.msra.mxu0 0
      %1909 = vmatprep.subr.bf16.mxu0 0
      %1910 = vmatpush1.bf16.msra.mxu0 0
      %1911 = vmatprep.subr.bf16.mxu0 0
      %1912 = vmatpush1.bf16.msra.mxu0 0
      %1913 = vmatprep.subr.bf16.mxu0 0
      %1914 = vmatpush1.bf16.msra.mxu0 0
      %1915 = vmatprep.subr.bf16.mxu0 0
      %1916 = vmatpush1.bf16.msra.mxu0 0
      %1917 = vmatprep.subr.bf16.mxu0 0
      %1918 = vmatpush1.bf16.msra.mxu0 0
      %1919 = vmatprep.subr.bf16.mxu0 0
      %1920 = vmatpush1.bf16.msra.mxu0 0
      %1921 = vmatprep.subr.bf16.mxu0 0
      %1922 = vmatpush1.bf16.msra.mxu0 0
      %1923 = vmatprep.subr.bf16.mxu0 0
      %1924 = vmatpush1.bf16.msra.mxu0 0
      %1925 = vmatprep.subr.bf16.mxu0 0
      %1926 = vmatpush1.bf16.msra.mxu0 0
      %1927 = vmatprep.mubr.bf16.mxu0 0
      %1928 = vmatmul.mubr.bf16.gmra.mrb[0].mxu0 %v1880
      %v1929 = vpop.f32.mrb[0].mxu0
      %v1930 = vadd.f32 0.0, %v1929
      %v1931 = vpop.f32.mrb[0].mxu0
      %v1932 = vpop.f32.mrb[0].mxu0
      %v1933 = vadd.f32 0.0, %v1932
      %v1934 = vpop.f32.mrb[0].mxu0
      %1935 = vmatprep.mubr.bf16.mxu0 0
      %1936 = vmatmul.mubr.bf16.gmra.mrb[0].mxu0 %v1883
      %v1937 = vpop.f32.mrb[0].mxu0
      %v1938 = vadd.f32 0.0, %v1937
      %v1939 = vpop.f32.mrb[0].mxu0
      %v1940 = vpop.f32.mrb[0].mxu0
      %v1941 = vadd.f32 0.0, %v1940
      %v1942 = vpop.f32.mrb[0].mxu0
      %1943 = vmatprep.mubr.bf16.mxu0 0
      %1944 = vmatmul.mubr.bf16.gmra.mrb[0].mxu0 %v1886
      %v1945 = vpop.f32.mrb[0].mxu0
      %v1946 = vadd.f32 0.0, %v1945
      %v1947 = vpop.f32.mrb[0].mxu0
      %v1948 = vpop.f32.mrb[0].mxu0
      %v1949 = vadd.f32 0.0, %v1948
      %v1950 = vpop.f32.mrb[0].mxu0
      %1951 = vmatprep.mubr.bf16.mxu0 0
      %1952 = vmatmul.mubr.bf16.gmra.mrb[0].mxu0 %v1889
      %v1953 = vpop.f32.mrb[0].mxu0
      %v1954 = vadd.f32 0.0, %v1953
      %v1955 = vpop.f32.mrb[0].mxu0
      %v1956 = vpop.f32.mrb[0].mxu0
      %v1957 = vadd.f32 0.0, %v1956
      %v1958 = vpop.f32.mrb[0].mxu0
      %1959 = vdwg.mxu0
      %v1960 = vld [vmem:[%s5] sm:$0x1]
      %v1962 = vlaneseq
      %v1963 = vshrl.u32 %v1962, 7
      %v1964 = vsub.s32 0, %v1963
      %v1965 = vrot.slane %v1960, %v1964
      %v1967 = vmul.f32 %v1930, %v1965
      %v1968 = vmul.f32 %v1933, %v1965
      %v1969 = vmul.f32 %v1938, %v1965
      %v1970 = vmul.f32 %v1941, %v1965
      %v1971 = vmul.f32 %v1946, %v1965
      %v1972 = vmul.f32 %v1949, %v1965
      %v1973 = vmul.f32 %v1954, %v1965
      %v1974 = vmul.f32 %v1957, %v1965
      %v1975 = vld [vmem:[%s6] sm:$0x1]
      %v1977 = vlaneseq
      %v1978 = vshrl.u32 %v1977, 7
      %v1979 = vsub.s32 0, %v1978
      %v1980 = vrot.slane %v1975, %v1979
      %v1982 = vadd.f32 %v1967, %v1980
      %v1983 = vadd.f32 %v1968, %v1980
      %v1984 = vadd.f32 %v1969, %v1980
      %v1985 = vadd.f32 %v1970, %v1980
      %v1986 = vadd.f32 %v1971, %v1980
      %v1987 = vadd.f32 %v1972, %v1980
      %v1988 = vadd.f32 %v1973, %v1980
      %v1989 = vadd.f32 %v1974, %v1980
      %v1990 = vmax.f32 %v1982, 0.0
      %v1991 = vmax.f32 %v1983, 0.0
      %v1992 = vmax.f32 %v1984, 0.0
      %v1993 = vmax.f32 %v1985, 0.0
      %v1994 = vmax.f32 %v1986, 0.0
      %v1995 = vmax.f32 %v1987, 0.0
      %v1996 = vmax.f32 %v1988, 0.0
      %v1997 = vmax.f32 %v1989, 0.0
      %1998 = vst.msk [vmem:[%s278] sm:$0xff] %vm1167, %v1990
      %1999 = vst.msk [vmem:[%s278 + $0x8] sm:$0xff] %vm1167, %v1991
      %2000 = vst.msk [vmem:[%s278 + $0x10] sm:$0xff] %vm1167, %v1992
      %2001 = vst.msk [vmem:[%s278 + $0x18] sm:$0xff] %vm1167, %v1993
      %2002 = vst.msk [vmem:[%s278 + $0x20] sm:$0xff] %vm1167, %v1994
      %2003 = vst.msk [vmem:[%s278 + $0x28] sm:$0xff] %vm1167, %v1995
      %2004 = vst.msk [vmem:[%s278 + $0x30] sm:$0xff] %vm1167, %v1996
      %2005 = vst.msk [vmem:[%s278 + $0x38] sm:$0xff] %vm1167, %v1997
      %p2006 = scmp.lt.s32.totalorder %s18, 1
      %s2007 = scalar_select %p2006, %s18, 1
      %s2008 = smul.addr %s2007, 8
      %s2009 = smul.addr %s2008, 8
      %s2010 = scalar_lea.vmem %s7, %s2009
      // Predicated region
      $region49: #{tpu_custom_call.1} parent=47 // pred_check
        %p2011 = pneg %p188
      $region50: #{tpu_custom_call.1} parent=47 // pred_check_branch
        %2013 = sbr.rel (%p2011) target = $region52
      $region51: #{tpu_custom_call.1} parent=47 // pred_region
        _
      $region52: #{tpu_custom_call.1} parent=47 // pred_fallthru
        _
    $region48: #{tpu_custom_call.1} parent=5 // pred_fallthru
      _
    %p2014 = scmp.le.s32.totalorder 2, %s13
    // Predicated region
    $region53: #{tpu_custom_call.1} parent=5 // pred_check
      %p2015 = pneg %p2014
    $region54: #{tpu_custom_call.1} parent=5 // pred_check_branch
      %2017 = sbr.rel (%p2015) target = $region56
    $region55: #{tpu_custom_call.1} parent=5 // pred_region
      %s2018 = ssub.s32 %s13, 2
      // Predicated region
      $region57: #{tpu_custom_call.1} parent=55 // pred_check
        %p2019 = pneg %p194
      $region58: #{tpu_custom_call.1} parent=55 // pred_check_branch
        %2021 = sbr.rel (%p2019) target = $region60
      $region59: #{tpu_custom_call.1} parent=55 // pred_region
        %p2022 = scmp.lt.s32.totalorder %s19, 1
        %s2023 = scalar_select %p2022, %s19, 1
        %s2024 = smul.addr %s2023, 8
        %s2025 = smul.addr %s2024, 8
        %s2026 = scalar_lea.vmem %s7, %s2025
      $region60: #{tpu_custom_call.1} parent=55 // pred_fallthru
        _
    $region56: #{tpu_custom_call.1} parent=5 // pred_fallthru
      _
  $region6: #{tpu_custom_call.1} parent=0 // loop_footer
    %s17 = sadd.s32 1, %s13
  $region7: #{tpu_custom_call.1} parent=0 // loop_footer_branch
    %12 = sbr.rel target = $region3
  $region8: #{tpu_custom_call.1} parent=0 // loop_exit
    _

</llo_original>
